<compile_context>
chip_gen: v7x
topology: tpu7x:2x2x1
jax: 0.10.0
libtpu: 0.0.40
codegen_flags: <defaults>
</compile_context>

<pallas_src>
import functools

import jax
import jax.numpy as jnp
from jax.experimental import pallas as pl
from jax.experimental.pallas import tpu as pltpu


# ---------------------------------------------------------------------------
# Helpers
# ---------------------------------------------------------------------------
def _round_up(x, m):
    return ((x + m - 1) // m) * m


def _pad2d(x, rows, cols):
    r, c = x.shape
    if r == rows and c == cols:
        return x
    return jnp.pad(x, ((0, rows - r), (0, cols - c)))


_TM = 512   # output-row tile (sublane axis)
_TK = 512   # contraction tile over nodes (lane axis of A)


def _tile_plan(n_nodes):
    """Pick (tm, tk, n_pad).  Keep >=2 row tiles when possible (v7x megacore)."""
    n128 = _round_up(n_nodes, 128)
    tm = _TM
    while tm > 128 and n128 // tm < 2:
        tm //= 2
    tm = min(tm, n128)
    tk = min(_TK, n128)
    # one common node padding, divisible by both tm and tk (both are 128*2^k)
    n_pad = _round_up(n_nodes, max(tm, tk))
    return tm, tk, n_pad


# ---------------------------------------------------------------------------
# Fused GCN-layer kernel:  out = act( dinv * (A @ Xn) @ W + b )
#   grid = (rows, contraction-over-nodes); f32 VMEM accumulator; bf16 MXU ops.
# ---------------------------------------------------------------------------
def _gcn_layer_kernel(a_ref, xn_ref, w_ref, bias_ref, dinv_ref,
                      o_ref, acc_ref, *, act, valid_cols, tk):
    k = pl.program_id(1)

    @pl.when(k == 0)
    def _():
        acc_ref[...] = jnp.zeros_like(acc_ref)

    # Xn is resident in VMEM (constant index map); slice the current K stripe.
    off = pl.multiple_of(k * tk, tk)
    xk = xn_ref[pl.ds(off, tk), :]                        # (tk, f_in_pad) bf16
    acc_ref[...] += jnp.dot(a_ref[...], xk,
                            preferred_element_type=jnp.float32)

    @pl.when(k == pl.num_programs(1) - 1)
    def _():
        # Left D^{-1/2} row scaling (normalization moved off A), then the tiny
        # (tm, F_in) @ (F_in, F_out) weight transform + bias + activation.
        agg = (acc_ref[...] * dinv_ref[...]).astype(jnp.bfloat16)
        h = jnp.dot(agg, w_ref[...], preferred_element_type=jnp.float32)
        h = h + bias_ref[...]
        if act == "relu":
            h = jnp.maximum(h, 0.0)
        elif act == "log_softmax":
            # mask lanes that are zero-padding of the true output-feature dim
            lane = jax.lax.broadcasted_iota(jnp.int32, h.shape, 1)
            h = jnp.where(lane < valid_cols, h, -jnp.inf)
            m = jnp.max(h, axis=1, keepdims=True)
            s = h - m
            lse = jnp.log(jnp.sum(jnp.exp(s), axis=1, keepdims=True))
            h = s - lse
        o_ref[...] = h.astype(o_ref.dtype)


def gcn_layer(a_pad, xn, w, b, dinv_col, *, act, tm, tk):
    """One fused GCNConv(+act).  a_pad: (n_pad, n_pad) bf16 unnormalized A+I.
    xn: (<=n_pad, F_in) pre-scaled features.  Returns padded (n_pad, F_out_pad)."""
    assert act in ("relu", "log_softmax", "none")
    n_pad = a_pad.shape[0]
    f_in, f_out = w.shape
    f_in_pad = _round_up(f_in, 128)
    f_out_pad = _round_up(f_out, 128)

    xn_p = _pad2d(xn.astype(jnp.bfloat16), n_pad, f_in_pad)
    w_p = _pad2d(w.astype(jnp.bfloat16), f_in_pad, f_out_pad)
    b_p = _pad2d(b.reshape(1, -1).astype(jnp.float32), 1, f_out_pad)
    dinv_p = _pad2d(dinv_col.astype(jnp.float32), n_pad, 1)

    grid = (n_pad // tm, n_pad // tk)
    out_dtype = jnp.float32 if act == "log_softmax" else jnp.bfloat16
    kernel = functools.partial(_gcn_layer_kernel, act=act,
                               valid_cols=f_out, tk=tk)

    return pl.pallas_call(
        kernel,
        out_shape=jax.ShapeDtypeStruct((n_pad, f_out_pad), out_dtype),
        grid_spec=pltpu.PrefetchScalarGridSpec(
            num_scalar_prefetch=0,
            grid=grid,
            in_specs=[
                pl.BlockSpec((tm, tk), lambda i, kk: (i, kk)),            # A tile
                pl.BlockSpec((n_pad, f_in_pad), lambda i, kk: (0, 0)),    # Xn resident
                pl.BlockSpec((f_in_pad, f_out_pad), lambda i, kk: (0, 0)),# W resident
                pl.BlockSpec((1, f_out_pad), lambda i, kk: (0, 0)),       # bias resident
                pl.BlockSpec((tm, 1), lambda i, kk: (i, 0)),              # dinv rows
            ],
            out_specs=pl.BlockSpec((tm, f_out_pad), lambda i, kk: (i, 0)),
            scratch_shapes=[pltpu.VMEM((tm, f_in_pad), jnp.float32)],
        ),
        compiler_params=pltpu.CompilerParams(
            dimension_semantics=("parallel", "arbitrary"),
        ),
    )(a_pad, xn_p, w_p, b_p, dinv_p)


# ---------------------------------------------------------------------------
# Glue: edge_index -> (A + I) in the MXU operand dtype, plus D^{-1/2}
# (normalization is applied to features / epilogue, not to A).
# ---------------------------------------------------------------------------
def build_adjacency(edge_index, num_nodes):
    src = edge_index[0]
    tgt = edge_index[1]
    loop = jnp.arange(num_nodes, dtype=edge_index.dtype)
    src = jnp.concatenate([src, loop])
    tgt = jnp.concatenate([tgt, loop])
    # Built ONCE, directly in bf16: entries are small integers -> exact.
    a = jnp.zeros((num_nodes, num_nodes), jnp.bfloat16).at[tgt, src].add(1.0)
    deg = jnp.sum(a, axis=1, dtype=jnp.float32)
    dinv = jnp.where(deg > 0, jax.lax.rsqrt(deg), 0.0)
    return a, dinv


# ---------------------------------------------------------------------------
# GCN model (inference semantics)
# ---------------------------------------------------------------------------
def init_gcn_params(key, in_channels, hidden_channels, out_channels):
    k1, k2 = jax.random.split(key)
    w1 = jax.random.normal(k1, (in_channels, hidden_channels), jnp.float32)
    w1 = w1 * jnp.sqrt(2.0 / (in_channels + hidden_channels))
    w2 = jax.random.normal(k2, (hidden_channels, out_channels), jnp.float32)
    w2 = w2 * jnp.sqrt(2.0 / (hidden_channels + out_channels))
    b1 = jnp.zeros((hidden_channels,), jnp.float32)
    b2 = jnp.zeros((out_channels,), jnp.float32)
    return (w1, b1), (w2, b2)


def gcn_forward(params, x, edge_index):
    (w1, b1), (w2, b2) = params
    n = x.shape[0]
    out_c = w2.shape[1]

    tm, tk, n_pad = _tile_plan(n)

    # A+I built once, padded once, shared by both layers (padded columns are
    # zero, so padded feature rows can never leak into valid outputs).
    a, dinv = build_adjacency(edge_index, n)
    a_pad = _pad2d(a, n_pad, n_pad)
    dinv_col = _pad2d(dinv.reshape(-1, 1), n_pad, 1)   # zero for padded rows

    # layer 1: fused GCNConv + ReLU
    xn1 = dinv[:, None] * x                            # right D^{-1/2} on features
    h = gcn_layer(a_pad, xn1, w1, b1, dinv_col, act="relu", tm=tm, tk=tk)

    # F.dropout(p=0.5, training=self.training): identity in eval mode.
    # TODO(synk): training-mode dropout (pltpu.prng_random_bits mask) not wired in.

    # layer 2: fused GCNConv + log_softmax
    xn2 = dinv_col * h                                 # padded rows scaled to 0
    out = gcn_layer(a_pad, xn2, w2, b2, dinv_col, act="log_softmax", tm=tm, tk=tk)
    return out[:n, :out_c]


def gcn_reference(params, x, edge_index):
    (w1, b1), (w2, b2) = params
    n = x.shape[0]
    src, tgt = edge_index[0], edge_index[1]
    loop = jnp.arange(n, dtype=edge_index.dtype)
    src = jnp.concatenate([src, loop])
    tgt = jnp.concatenate([tgt, loop])
    a = jnp.zeros((n, n), jnp.float32).at[tgt, src].add(1.0)
    deg = jnp.sum(a, axis=1)
    dinv = jnp.where(deg > 0, jax.lax.rsqrt(deg), 0.0)
    a_hat = dinv[:, None] * a * dinv[None, :]
    h = jnp.maximum(a_hat @ (x @ w1) + b1, 0.0)
    z = a_hat @ (h @ w2) + b2
    return jax.nn.log_softmax(z, axis=1)


if __name__ == "__main__":
    N = 32            # nodes
    E = 64            # edges
    IN_C = 16
    HID_C = 32
    OUT_C = 8

    key = jax.random.PRNGKey(0)
    kx, ke, kp = jax.random.split(key, 3)

    x = jax.random.normal(kx, (N, IN_C), jnp.float32)
    edge_index = jax.random.randint(ke, (2, E), 0, N, dtype=jnp.int32)
    params = init_gcn_params(kp, IN_C, HID_C, OUT_C)

    fwd = jax.jit(gcn_forward)
    out = jax.block_until_ready(fwd(params, x, edge_index))

    assert out.shape == (N, OUT_C)
    assert bool(jnp.all(jnp.isfinite(out)))
    # log_softmax rows must sum to 1 in prob space
    assert jnp.allclose(jnp.sum(jnp.exp(out), axis=1), 1.0, atol=1e-3)
    # matches the pure-JAX f32 reference up to bf16 operand error
    ref = gcn_reference(params, x, edge_index)
    assert jnp.allclose(out, ref, atol=5e-2), float(jnp.max(jnp.abs(out - ref)))
    print("KERNEL_OK")
</pallas_src>

<mosaic_0001>
module attributes {stable_mosaic.version = 11 : i64} {
  func.func @_gcn_layer_kernel(%arg0: i32, %arg1: i32, %arg2: memref<128x128xbf16, #tpu.memory_space<vmem>>, %arg3: memref<128x128xbf16, #tpu.memory_space<vmem>>, %arg4: memref<128x128xbf16, #tpu.memory_space<vmem>>, %arg5: memref<1x128xf32, #tpu.memory_space<vmem>>, %arg6: memref<128x1xf32, #tpu.memory_space<vmem>>, %arg7: memref<128x128xbf16, #tpu.memory_space<vmem>>, %arg8: memref<128x128xf32, #tpu.memory_space<vmem>>) attributes {dimension_semantics = [#tpu.dimension_semantics<parallel>, #tpu.dimension_semantics<arbitrary>], iteration_bounds = array<i64: 1, 1>, scalar_prefetch = 0 : i64, scratch_operands = 1 : i64, tpu.core_type = #tpu.core_type<tc>, window_params = [{transform_indices = @transform_0, window_bounds = array<i64: 128, 128>}, {pipeline_mode = #tpu.pipeline_mode<synchronous>, transform_indices = @transform_1, window_bounds = array<i64: 128, 128>}, {pipeline_mode = #tpu.pipeline_mode<synchronous>, transform_indices = @transform_2, window_bounds = array<i64: 128, 128>}, {pipeline_mode = #tpu.pipeline_mode<synchronous>, transform_indices = @transform_3, window_bounds = array<i64: 1, 128>}, {transform_indices = @transform_4, window_bounds = array<i64: 128, 1>}, {transform_indices = @transform_5, window_bounds = array<i64: 128, 128>}]} {
    %c0_i32 = arith.constant 0 : i32
    %0 = arith.cmpi eq, %arg1, %c0_i32 : i32
    %1 = arith.extui %0 : i1 to i32
    %c0_i32_0 = arith.constant 0 : i32
    %2 = arith.cmpi ne, %1, %c0_i32_0 : i32
    scf.if %2 {
      %cst_9 = arith.constant 0.000000e+00 : f32
      %15 = vector.broadcast %cst_9 : f32 to vector<128x128xf32>
      %c0_10 = arith.constant 0 : index
      %c0_11 = arith.constant 0 : index
      %16 = vector.load %arg8[%c0_10, %c0_11] : memref<128x128xf32, #tpu.memory_space<vmem>>, vector<128x128xf32>
      tpu.vector_store %arg8[%c0_10, %c0_11], %15 {strides = array<i32>} : memref<128x128xf32, #tpu.memory_space<vmem>>, vector<128x128xf32>,
    } else {
    }
    %c128_i32 = arith.constant 128 : i32
    %3 = arith.muli %arg1, %c128_i32 : i32
    %4 = tpu.assume_multiple %3, 128 : i32
    %5 = arith.index_cast %4 : i32 to index
    %c0 = arith.constant 0 : index
    %6 = vector.load %arg3[%5, %c0] : memref<128x128xbf16, #tpu.memory_space<vmem>>, vector<128x128xbf16>
    %c0_1 = arith.constant 0 : index
    %c0_2 = arith.constant 0 : index
    %7 = vector.load %arg8[%c0_1, %c0_2] : memref<128x128xf32, #tpu.memory_space<vmem>>, vector<128x128xf32>
    %c0_3 = arith.constant 0 : index
    %c0_4 = arith.constant 0 : index
    %8 = vector.load %arg2[%c0_3, %c0_4] : memref<128x128xbf16, #tpu.memory_space<vmem>>, vector<128x128xbf16>
    %cst = arith.constant dense<0.000000e+00> : vector<128x128xf32>
    %9 = tpu.matmul %8, %6, %cst {dimension_numbers = #tpu.dot_dimension_numbers<[1], [0], [0], [1], [0, 0, 1, 1], [], []>} : vector<128x128xbf16>, vector<128x128xbf16>, vector<128x128xf32> -> vector<128x128xf32>
    %10 = arith.addf %7, %9 : vector<128x128xf32>
    %c0_5 = arith.constant 0 : index
    %c0_6 = arith.constant 0 : index
    %11 = vector.load %arg8[%c0_5, %c0_6] : memref<128x128xf32, #tpu.memory_space<vmem>>, vector<128x128xf32>
    tpu.vector_store %arg8[%c0_5, %c0_6], %10 {strides = array<i32>} : memref<128x128xf32, #tpu.memory_space<vmem>>, vector<128x128xf32>,
    %c0_i32_7 = arith.constant 0 : i32
    %12 = arith.cmpi eq, %arg1, %c0_i32_7 : i32
    %13 = arith.extui %12 : i1 to i32
    %c0_i32_8 = arith.constant 0 : i32
    %14 = arith.cmpi ne, %13, %c0_i32_8 : i32
    scf.if %14 {
      %c0_9 = arith.constant 0 : index
      %c0_10 = arith.constant 0 : index
      %15 = vector.load %arg8[%c0_9, %c0_10] : memref<128x128xf32, #tpu.memory_space<vmem>>, vector<128x128xf32>
      %c0_11 = arith.constant 0 : index
      %c0_12 = arith.constant 0 : index
      %16 = vector.load %arg6[%c0_11, %c0_12] : memref<128x1xf32, #tpu.memory_space<vmem>>, vector<128x1xf32>
      %17 = vector.broadcast %16 : vector<128x1xf32> to vector<128x128xf32>
      %18 = arith.mulf %15, %17 : vector<128x128xf32>
      %19 = arith.truncf %18 : vector<128x128xf32> to vector<128x128xbf16>
      %c0_13 = arith.constant 0 : index
      %c0_14 = arith.constant 0 : index
      %20 = vector.load %arg4[%c0_13, %c0_14] : memref<128x128xbf16, #tpu.memory_space<vmem>>, vector<128x128xbf16>
      %cst_15 = arith.constant dense<0.000000e+00> : vector<128x128xf32>
      %21 = tpu.matmul %19, %20, %cst_15 {dimension_numbers = #tpu.dot_dimension_numbers<[1], [0], [0], [1], [0, 0, 1, 1], [], []>} : vector<128x128xbf16>, vector<128x128xbf16>, vector<128x128xf32> -> vector<128x128xf32>
      %c0_16 = arith.constant 0 : index
      %c0_17 = arith.constant 0 : index
      %22 = vector.load %arg5[%c0_16, %c0_17] : memref<1x128xf32, #tpu.memory_space<vmem>>, vector<1x128xf32>
      %23 = vector.broadcast %22 : vector<1x128xf32> to vector<128x128xf32>
      %24 = arith.addf %21, %23 : vector<128x128xf32>
      %cst_18 = arith.constant 0.000000e+00 : f32
      %25 = vector.broadcast %cst_18 : f32 to vector<128x128xf32>
      %26 = arith.maximumf %24, %25 : vector<128x128xf32>
      %27 = arith.truncf %26 : vector<128x128xf32> to vector<128x128xbf16>
      %c0_19 = arith.constant 0 : index
      %c0_20 = arith.constant 0 : index
      %28 = vector.load %arg7[%c0_19, %c0_20] : memref<128x128xbf16, #tpu.memory_space<vmem>>, vector<128x128xbf16>
      tpu.vector_store %arg7[%c0_19, %c0_20], %27 {strides = array<i32>} : memref<128x128xbf16, #tpu.memory_space<vmem>>, vector<128x128xbf16>,
    } else {
    }
    return
  }
  func.func @transform_0(%arg0: i32, %arg1: i32) -> (i32, i32) {
    %c0_i32 = arith.constant 0 : i32
    return %arg0, %arg1 : i32, i32
  }
  func.func @transform_1(%arg0: i32, %arg1: i32) -> (i32, i32) {
    %c0_i32 = arith.constant 0 : i32
    %c0_i32_0 = arith.constant 0 : i32
    %c0_i32_1 = arith.constant 0 : i32
    return %c0_i32, %c0_i32_0 : i32, i32
  }
  func.func @transform_2(%arg0: i32, %arg1: i32) -> (i32, i32) {
    %c0_i32 = arith.constant 0 : i32
    %c0_i32_0 = arith.constant 0 : i32
    %c0_i32_1 = arith.constant 0 : i32
    return %c0_i32, %c0_i32_0 : i32, i32
  }
  func.func @transform_3(%arg0: i32, %arg1: i32) -> (i32, i32) {
    %c0_i32 = arith.constant 0 : i32
    %c0_i32_0 = arith.constant 0 : i32
    %c0_i32_1 = arith.constant 0 : i32
    return %c0_i32, %c0_i32_0 : i32, i32
  }
  func.func @transform_4(%arg0: i32, %arg1: i32) -> (i32, i32) {
    %c0_i32 = arith.constant 0 : i32
    %c0_i32_0 = arith.constant 0 : i32
    return %arg0, %c0_i32 : i32, i32
  }
  func.func @transform_5(%arg0: i32, %arg1: i32) -> (i32, i32) {
    %c0_i32 = arith.constant 0 : i32
    %c0_i32_0 = arith.constant 0 : i32
    return %arg0, %c0_i32 : i32, i32
  }
}

module attributes {stable_mosaic.version = 11 : i64} {
  func.func @_gcn_layer_kernel(%arg0: i32, %arg1: i32, %arg2: memref<128x128xbf16, #tpu.memory_space<vmem>>, %arg3: memref<128x128xbf16, #tpu.memory_space<vmem>>, %arg4: memref<128x128xbf16, #tpu.memory_space<vmem>>, %arg5: memref<1x128xf32, #tpu.memory_space<vmem>>, %arg6: memref<128x1xf32, #tpu.memory_space<vmem>>, %arg7: memref<128x128xf32, #tpu.memory_space<vmem>>, %arg8: memref<128x128xf32, #tpu.memory_space<vmem>>) attributes {dimension_semantics = [#tpu.dimension_semantics<parallel>, #tpu.dimension_semantics<arbitrary>], iteration_bounds = array<i64: 1, 1>, scalar_prefetch = 0 : i64, scratch_operands = 1 : i64, tpu.core_type = #tpu.core_type<tc>, window_params = [{transform_indices = @transform_0, window_bounds = array<i64: 128, 128>}, {pipeline_mode = #tpu.pipeline_mode<synchronous>, transform_indices = @transform_1, window_bounds = array<i64: 128, 128>}, {pipeline_mode = #tpu.pipeline_mode<synchronous>, transform_indices = @transform_2, window_bounds = array<i64: 128, 128>}, {pipeline_mode = #tpu.pipeline_mode<synchronous>, transform_indices = @transform_3, window_bounds = array<i64: 1, 128>}, {transform_indices = @transform_4, window_bounds = array<i64: 128, 1>}, {transform_indices = @transform_5, window_bounds = array<i64: 128, 128>}]} {
    %c0_i32 = arith.constant 0 : i32
    %0 = arith.cmpi eq, %arg1, %c0_i32 : i32
    %1 = arith.extui %0 : i1 to i32
    %c0_i32_0 = arith.constant 0 : i32
    %2 = arith.cmpi ne, %1, %c0_i32_0 : i32
    scf.if %2 {
      %cst_9 = arith.constant 0.000000e+00 : f32
      %15 = vector.broadcast %cst_9 : f32 to vector<128x128xf32>
      %c0_10 = arith.constant 0 : index
      %c0_11 = arith.constant 0 : index
      %16 = vector.load %arg8[%c0_10, %c0_11] : memref<128x128xf32, #tpu.memory_space<vmem>>, vector<128x128xf32>
      tpu.vector_store %arg8[%c0_10, %c0_11], %15 {strides = array<i32>} : memref<128x128xf32, #tpu.memory_space<vmem>>, vector<128x128xf32>,
    } else {
    }
    %c128_i32 = arith.constant 128 : i32
    %3 = arith.muli %arg1, %c128_i32 : i32
    %4 = tpu.assume_multiple %3, 128 : i32
    %5 = arith.index_cast %4 : i32 to index
    %c0 = arith.constant 0 : index
    %6 = vector.load %arg3[%5, %c0] : memref<128x128xbf16, #tpu.memory_space<vmem>>, vector<128x128xbf16>
    %c0_1 = arith.constant 0 : index
    %c0_2 = arith.constant 0 : index
    %7 = vector.load %arg8[%c0_1, %c0_2] : memref<128x128xf32, #tpu.memory_space<vmem>>, vector<128x128xf32>
    %c0_3 = arith.constant 0 : index
    %c0_4 = arith.constant 0 : index
    %8 = vector.load %arg2[%c0_3, %c0_4] : memref<128x128xbf16, #tpu.memory_space<vmem>>, vector<128x128xbf16>
    %cst = arith.constant dense<0.000000e+00> : vector<128x128xf32>
    %9 = tpu.matmul %8, %6, %cst {dimension_numbers = #tpu.dot_dimension_numbers<[1], [0], [0], [1], [0, 0, 1, 1], [], []>} : vector<128x128xbf16>, vector<128x128xbf16>, vector<128x128xf32> -> vector<128x128xf32>
    %10 = arith.addf %7, %9 : vector<128x128xf32>
    %c0_5 = arith.constant 0 : index
    %c0_6 = arith.constant 0 : index
    %11 = vector.load %arg8[%c0_5, %c0_6] : memref<128x128xf32, #tpu.memory_space<vmem>>, vector<128x128xf32>
    tpu.vector_store %arg8[%c0_5, %c0_6], %10 {strides = array<i32>} : memref<128x128xf32, #tpu.memory_space<vmem>>, vector<128x128xf32>,
    %c0_i32_7 = arith.constant 0 : i32
    %12 = arith.cmpi eq, %arg1, %c0_i32_7 : i32
    %13 = arith.extui %12 : i1 to i32
    %c0_i32_8 = arith.constant 0 : i32
    %14 = arith.cmpi ne, %13, %c0_i32_8 : i32
    scf.if %14 {
      %c0_9 = arith.constant 0 : index
      %c0_10 = arith.constant 0 : index
      %15 = vector.load %arg8[%c0_9, %c0_10] : memref<128x128xf32, #tpu.memory_space<vmem>>, vector<128x128xf32>
      %c0_11 = arith.constant 0 : index
      %c0_12 = arith.constant 0 : index
      %16 = vector.load %arg6[%c0_11, %c0_12] : memref<128x1xf32, #tpu.memory_space<vmem>>, vector<128x1xf32>
      %17 = vector.broadcast %16 : vector<128x1xf32> to vector<128x128xf32>
      %18 = arith.mulf %15, %17 : vector<128x128xf32>
      %19 = arith.truncf %18 : vector<128x128xf32> to vector<128x128xbf16>
      %c0_13 = arith.constant 0 : index
      %c0_14 = arith.constant 0 : index
      %20 = vector.load %arg4[%c0_13, %c0_14] : memref<128x128xbf16, #tpu.memory_space<vmem>>, vector<128x128xbf16>
      %cst_15 = arith.constant dense<0.000000e+00> : vector<128x128xf32>
      %21 = tpu.matmul %19, %20, %cst_15 {dimension_numbers = #tpu.dot_dimension_numbers<[1], [0], [0], [1], [0, 0, 1, 1], [], []>} : vector<128x128xbf16>, vector<128x128xbf16>, vector<128x128xf32> -> vector<128x128xf32>
      %c0_16 = arith.constant 0 : index
      %c0_17 = arith.constant 0 : index
      %22 = vector.load %arg5[%c0_16, %c0_17] : memref<1x128xf32, #tpu.memory_space<vmem>>, vector<1x128xf32>
      %23 = vector.broadcast %22 : vector<1x128xf32> to vector<128x128xf32>
      %24 = arith.addf %21, %23 : vector<128x128xf32>
      %25 = tpu.iota {dimensions = array<i32: 1>} : vector<128x128xi32>
      %c8_i32 = arith.constant 8 : i32
      %26 = vector.broadcast %c8_i32 : i32 to vector<128x128xi32>
      %27 = arith.cmpi slt, %25, %26 : vector<128x128xi32>
      %cst_18 = arith.constant 0xFF800000 : f32
      %28 = vector.broadcast %cst_18 : f32 to vector<128x128xf32>
      %29 = arith.select %27, %24, %28 : vector<128x128xi1>, vector<128x128xf32>
      %cst_19 = arith.constant dense<0xFF800000> : vector<128xf32>
      %30 = vector.multi_reduction <maximumf>, %29, %cst_19 [1] : vector<128x128xf32> to vector<128xf32>
      %31 = vector.shape_cast %30 : vector<128xf32> to vector<128x1xf32>
      %32 = vector.broadcast %31 : vector<128x1xf32> to vector<128x128xf32>
      %33 = arith.subf %29, %32 : vector<128x128xf32>
      %34 = math.exp %33 : vector<128x128xf32>
      %cst_20 = arith.constant dense<0.000000e+00> : vector<128xf32>
      %35 = vector.multi_reduction <add>, %34, %cst_20 [1] : vector<128x128xf32> to vector<128xf32>
      %36 = vector.shape_cast %35 : vector<128xf32> to vector<128x1xf32>
      %37 = math.log %36 : vector<128x1xf32>
      %38 = vector.broadcast %37 : vector<128x1xf32> to vector<128x128xf32>
      %39 = arith.subf %33, %38 : vector<128x128xf32>
      %c0_21 = arith.constant 0 : index
      %c0_22 = arith.constant 0 : index
      %40 = vector.load %arg7[%c0_21, %c0_22] : memref<128x128xf32, #tpu.memory_space<vmem>>, vector<128x128xf32>
      tpu.vector_store %arg7[%c0_21, %c0_22], %39 {strides = array<i32>} : memref<128x128xf32, #tpu.memory_space<vmem>>, vector<128x128xf32>,
    } else {
    }
    return
  }
  func.func @transform_0(%arg0: i32, %arg1: i32) -> (i32, i32) {
    %c0_i32 = arith.constant 0 : i32
    return %arg0, %arg1 : i32, i32
  }
  func.func @transform_1(%arg0: i32, %arg1: i32) -> (i32, i32) {
    %c0_i32 = arith.constant 0 : i32
    %c0_i32_0 = arith.constant 0 : i32
    %c0_i32_1 = arith.constant 0 : i32
    return %c0_i32, %c0_i32_0 : i32, i32
  }
  func.func @transform_2(%arg0: i32, %arg1: i32) -> (i32, i32) {
    %c0_i32 = arith.constant 0 : i32
    %c0_i32_0 = arith.constant 0 : i32
    %c0_i32_1 = arith.constant 0 : i32
    return %c0_i32, %c0_i32_0 : i32, i32
  }
  func.func @transform_3(%arg0: i32, %arg1: i32) -> (i32, i32) {
    %c0_i32 = arith.constant 0 : i32
    %c0_i32_0 = arith.constant 0 : i32
    %c0_i32_1 = arith.constant 0 : i32
    return %c0_i32, %c0_i32_0 : i32, i32
  }
  func.func @transform_4(%arg0: i32, %arg1: i32) -> (i32, i32) {
    %c0_i32 = arith.constant 0 : i32
    %c0_i32_0 = arith.constant 0 : i32
    return %arg0, %c0_i32 : i32, i32
  }
  func.func @transform_5(%arg0: i32, %arg1: i32) -> (i32, i32) {
    %c0_i32 = arith.constant 0 : i32
    %c0_i32_0 = arith.constant 0 : i32
    return %arg0, %c0_i32 : i32, i32
  }
}

</mosaic_0001>

<llo_original>
// kernel: gcn_forward.2
$region0: #{gcn_forward.2}
  #allocation0 [shape = 'u32[]', space=smem, size = 0x4, offset = 0x4, fixed_abs, tag = 'smem constant byte address 0x4 - core index']
  #allocation1 [shape = 'u32[144,128]{1,0:T(1,128)}', space=vmem, size = 0x12000, scoped, tag = 'internal scratch']
  #allocation2 [shape = 'f32[128,128]{1,0:T(8,128)}', space=vmem, size = 0x10000, scoped, tag = 'scratch operand']
  %s0 = inlined_call_operand.vmem [shape: bf16[128,128], index: 0, kind: input, shape index: {}]
  %s1 = inlined_call_operand.vmem [shape: bf16[128,128], index: 1, kind: input, shape index: {}]
  %s2 = inlined_call_operand.vmem [shape: bf16[128,128], index: 2, kind: input, shape index: {}]
  %s3 = inlined_call_operand.vmem [shape: f32[1,128], index: 3, kind: input, shape index: {}]
  %s4 = inlined_call_operand.vmem [shape: f32[128,1], index: 4, kind: input, shape index: {}]
  %s5 = inlined_call_operand.vmem [shape: bf16[128,128], index: 5, kind: output, shape index: {}]
  %s6 = sld [smem:[#allocation0]]
  $region38: #{gcn_forward.2} parent=0
    _
  %s8 = ssub.s32 1, %s6
  %s9 = scalar_select 0, %s8, %s6
  // Predicated region
  $region2: #{gcn_forward.2} parent=0 // pred_check
    _
  $region3: #{gcn_forward.2} parent=0 // pred_check_branch
    %11 = sbr.rel (0) target = $region5
  $region4: #{gcn_forward.2} parent=0 // pred_region
    _
  $region5: #{gcn_forward.2} parent=0 // pred_fallthru
    _
  // Predicated region
  $region6: #{gcn_forward.2} parent=0 // pred_check
    _
  $region7: #{gcn_forward.2} parent=0 // pred_check_branch
    %13 = sbr.rel (0) target = $region9
  $region8: #{gcn_forward.2} parent=0 // pred_region
    _
  $region9: #{gcn_forward.2} parent=0 // pred_fallthru
    _
  // Predicated region
  $region10: #{gcn_forward.2} parent=0 // pred_check
    _
  $region11: #{gcn_forward.2} parent=0 // pred_check_branch
    %15 = sbr.rel (0) target = $region13
  $region12: #{gcn_forward.2} parent=0 // pred_region
    _
  $region13: #{gcn_forward.2} parent=0 // pred_fallthru
    _
  // Predicated region
  $region14: #{gcn_forward.2} parent=0 // pred_check
    _
  $region15: #{gcn_forward.2} parent=0 // pred_check_branch
    %17 = sbr.rel (0) target = $region17
  $region16: #{gcn_forward.2} parent=0 // pred_region
    _
  $region17: #{gcn_forward.2} parent=0 // pred_fallthru
    _
  // Predicated region
  $region18: #{gcn_forward.2} parent=0 // pred_check
    _
  $region19: #{gcn_forward.2} parent=0 // pred_check_branch
    %19 = sbr.rel (0) target = $region21
  $region20: #{gcn_forward.2} parent=0 // pred_region
    _
  $region21: #{gcn_forward.2} parent=0 // pred_fallthru
    _
  %p21 = scmp.eq.s32.totalorder 0, 0
  // Predicated region
  $region22: #{gcn_forward.2} parent=0 // pred_check
    %p22 = pneg %p21
  $region23: #{gcn_forward.2} parent=0 // pred_check_branch
    %24 = sbr.rel (%p22) target = $region25
  $region24: #{gcn_forward.2} parent=0 // pred_region
    %25 = vst [vmem:[#allocation2] sm:$0xff] 0.0
    %26 = vst [vmem:[#allocation2 + $0x8] sm:$0xff] 0.0
    %27 = vst [vmem:[#allocation2 + $0x10] sm:$0xff] 0.0
    %28 = vst [vmem:[#allocation2 + $0x18] sm:$0xff] 0.0
    %29 = vst [vmem:[#allocation2 + $0x20] sm:$0xff] 0.0
    %30 = vst [vmem:[#allocation2 + $0x28] sm:$0xff] 0.0
    %31 = vst [vmem:[#allocation2 + $0x30] sm:$0xff] 0.0
    %32 = vst [vmem:[#allocation2 + $0x38] sm:$0xff] 0.0
    %33 = vst [vmem:[#allocation2 + $0x40] sm:$0xff] 0.0
    %34 = vst [vmem:[#allocation2 + $0x48] sm:$0xff] 0.0
    %35 = vst [vmem:[#allocation2 + $0x50] sm:$0xff] 0.0
    %36 = vst [vmem:[#allocation2 + $0x58] sm:$0xff] 0.0
    %37 = vst [vmem:[#allocation2 + $0x60] sm:$0xff] 0.0
    %38 = vst [vmem:[#allocation2 + $0x68] sm:$0xff] 0.0
    %39 = vst [vmem:[#allocation2 + $0x70] sm:$0xff] 0.0
    %40 = vst [vmem:[#allocation2 + $0x78] sm:$0xff] 0.0
  $region25: #{gcn_forward.2} parent=0 // pred_fallthru
    _
  %s41 = smul.u32 0, 128
  %s42 = sshra.s32 %s41, 3
  %s43 = sand.u32 %s41, 7
  %s44 = smul.addr %s42, 4
  %s45 = scalar_lea.vmem %s1, %s44
  %v46 = vld [vmem:[%s45] sm:$0xf]
  %v47 = vld [vmem:[%s45 + $0x4] sm:$0xf]
  %v48 = vld [vmem:[%s45 + $0x8] sm:$0xf]
  %v49 = vld [vmem:[%s45 + $0xc] sm:$0xf]
  %v50 = vld [vmem:[%s45 + $0x10] sm:$0xf]
  %v51 = vld [vmem:[%s45 + $0x14] sm:$0xf]
  %v52 = vld [vmem:[%s45 + $0x18] sm:$0xf]
  %v53 = vld [vmem:[%s45 + $0x1c] sm:$0xf]
  %v54 = vld [vmem:[%s45 + $0x20] sm:$0xf]
  %v55 = vld [vmem:[%s45 + $0x24] sm:$0xf]
  %v56 = vld [vmem:[%s45 + $0x28] sm:$0xf]
  %v57 = vld [vmem:[%s45 + $0x2c] sm:$0xf]
  %v58 = vld [vmem:[%s45 + $0x30] sm:$0xf]
  %v59 = vld [vmem:[%s45 + $0x34] sm:$0xf]
  %v60 = vld [vmem:[%s45 + $0x38] sm:$0xf]
  %v61 = vld [vmem:[%s45 + $0x3c] sm:$0xf]
  %v62 = vld [vmem:[#allocation2] sm:$0xff]
  %v63 = vld [vmem:[#allocation2 + $0x8] sm:$0xff]
  %v64 = vld [vmem:[#allocation2 + $0x10] sm:$0xff]
  %v65 = vld [vmem:[#allocation2 + $0x18] sm:$0xff]
  %v66 = vld [vmem:[#allocation2 + $0x20] sm:$0xff]
  %v67 = vld [vmem:[#allocation2 + $0x28] sm:$0xff]
  %v68 = vld [vmem:[#allocation2 + $0x30] sm:$0xff]
  %v69 = vld [vmem:[#allocation2 + $0x38] sm:$0xff]
  %v70 = vld [vmem:[#allocation2 + $0x40] sm:$0xff]
  %v71 = vld [vmem:[#allocation2 + $0x48] sm:$0xff]
  %v72 = vld [vmem:[#allocation2 + $0x50] sm:$0xff]
  %v73 = vld [vmem:[#allocation2 + $0x58] sm:$0xff]
  %v74 = vld [vmem:[#allocation2 + $0x60] sm:$0xff]
  %v75 = vld [vmem:[#allocation2 + $0x68] sm:$0xff]
  %v76 = vld [vmem:[#allocation2 + $0x70] sm:$0xff]
  %v77 = vld [vmem:[#allocation2 + $0x78] sm:$0xff]
  %v78 = vld [vmem:[%s0] sm:$0xf]
  %v79 = vld [vmem:[%s0 + $0x4] sm:$0xf]
  %v80 = vld [vmem:[%s0 + $0x8] sm:$0xf]
  %v81 = vld [vmem:[%s0 + $0xc] sm:$0xf]
  %v82 = vld [vmem:[%s0 + $0x10] sm:$0xf]
  %v83 = vld [vmem:[%s0 + $0x14] sm:$0xf]
  %v84 = vld [vmem:[%s0 + $0x18] sm:$0xf]
  %v85 = vld [vmem:[%s0 + $0x1c] sm:$0xf]
  %v86 = vld [vmem:[%s0 + $0x20] sm:$0xf]
  %v87 = vld [vmem:[%s0 + $0x24] sm:$0xf]
  %v88 = vld [vmem:[%s0 + $0x28] sm:$0xf]
  %v89 = vld [vmem:[%s0 + $0x2c] sm:$0xf]
  %v90 = vld [vmem:[%s0 + $0x30] sm:$0xf]
  %v91 = vld [vmem:[%s0 + $0x34] sm:$0xf]
  %v92 = vld [vmem:[%s0 + $0x38] sm:$0xf]
  %v93 = vld [vmem:[%s0 + $0x3c] sm:$0xf]
  %v110 = vunpack.c.l.b16 %v78
  %v111 = vunpack.c.l.b16 %v79
  %v112 = vunpack.c.l.b16 %v80
  %v113 = vunpack.c.l.b16 %v81
  %v114 = vunpack.c.l.b16 %v82
  %v115 = vunpack.c.l.b16 %v83
  %v116 = vunpack.c.l.b16 %v84
  %v117 = vunpack.c.l.b16 %v85
  %v118 = vunpack.c.l.b16 %v86
  %v119 = vunpack.c.l.b16 %v87
  %v120 = vunpack.c.l.b16 %v88
  %v121 = vunpack.c.l.b16 %v89
  %v122 = vunpack.c.l.b16 %v90
  %v123 = vunpack.c.l.b16 %v91
  %v124 = vunpack.c.l.b16 %v92
  %v125 = vunpack.c.l.b16 %v93
  %v126 = vpack.c.b16 %v111, %v110
  %v127 = vpack.c.b16 %v113, %v112
  %v128 = vpack.c.b16 %v115, %v114
  %v129 = vpack.c.b16 %v117, %v116
  %v130 = vpack.c.b16 %v119, %v118
  %v131 = vpack.c.b16 %v121, %v120
  %v132 = vpack.c.b16 %v123, %v122
  %v133 = vpack.c.b16 %v125, %v124
  %v158 = vunpack.c.l.b16 %v46
  %v159 = vunpack.c.l.b16 %v47
  %v160 = vunpack.c.l.b16 %v48
  %v161 = vunpack.c.l.b16 %v49
  %v162 = vunpack.c.l.b16 %v50
  %v163 = vunpack.c.l.b16 %v51
  %v164 = vunpack.c.l.b16 %v52
  %v165 = vunpack.c.l.b16 %v53
  %v166 = vunpack.c.l.b16 %v54
  %v167 = vunpack.c.l.b16 %v55
  %v168 = vunpack.c.l.b16 %v56
  %v169 = vunpack.c.l.b16 %v57
  %v170 = vunpack.c.l.b16 %v58
  %v171 = vunpack.c.l.b16 %v59
  %v172 = vunpack.c.l.b16 %v60
  %v173 = vunpack.c.l.b16 %v61
  %v174 = vpack.c.b16 %v159, %v158
  %v175 = vpack.c.b16 %v161, %v160
  %v176 = vpack.c.b16 %v163, %v162
  %v177 = vpack.c.b16 %v165, %v164
  %v178 = vpack.c.b16 %v167, %v166
  %v179 = vpack.c.b16 %v169, %v168
  %v180 = vpack.c.b16 %v171, %v170
  %v181 = vpack.c.b16 %v173, %v172
  %190 = vmatprep.subr.bf16.mxu0 0
  %191 = vmatpush1.bf16.msra.mxu0 %v174
  %192 = vmatprep.subr.bf16.mxu0 0
  %193 = vmatpush1.bf16.msra.mxu0 %v175
  %194 = vmatprep.subr.bf16.mxu0 0
  %195 = vmatpush1.bf16.msra.mxu0 %v176
  %196 = vmatprep.subr.bf16.mxu0 0
  %197 = vmatpush1.bf16.msra.mxu0 %v177
  %198 = vmatprep.subr.bf16.mxu0 0
  %199 = vmatpush1.bf16.msra.mxu0 %v178
  %200 = vmatprep.subr.bf16.mxu0 0
  %201 = vmatpush1.bf16.msra.mxu0 %v179
  %202 = vmatprep.subr.bf16.mxu0 0
  %203 = vmatpush1.bf16.msra.mxu0 %v180
  %204 = vmatprep.subr.bf16.mxu0 0
  %205 = vmatpush1.bf16.msra.mxu0 %v181
  %206 = vmatprep.subr.bf16.mxu0 0
  %207 = vmatpush1.bf16.msra.mxu0 0
  %208 = vmatprep.subr.bf16.mxu0 0
  %209 = vmatpush1.bf16.msra.mxu0 0
  %210 = vmatprep.subr.bf16.mxu0 0
  %211 = vmatpush1.bf16.msra.mxu0 0
  %212 = vmatprep.subr.bf16.mxu0 0
  %213 = vmatpush1.bf16.msra.mxu0 0
  %214 = vmatprep.subr.bf16.mxu0 0
  %215 = vmatpush1.bf16.msra.mxu0 0
  %216 = vmatprep.subr.bf16.mxu0 0
  %217 = vmatpush1.bf16.msra.mxu0 0
  %218 = vmatprep.subr.bf16.mxu0 0
  %219 = vmatpush1.bf16.msra.mxu0 0
  %220 = vmatprep.subr.bf16.mxu0 0
  %221 = vmatpush1.bf16.msra.mxu0 0
  %222 = vmatprep.mubr.bf16.mxu0 0
  %223 = vmatmul.mubr.bf16.gmra.mrb[0].mxu0 %v126
  %v224 = vpop.f32.mrb[0].mxu0
  %v225 = vadd.f32 0.0, %v224
  %v226 = vpop.f32.mrb[0].mxu0
  %v227 = vpop.f32.mrb[0].mxu0
  %v228 = vadd.f32 0.0, %v227
  %v229 = vpop.f32.mrb[0].mxu0
  %230 = vmatprep.mubr.bf16.mxu0 0
  %231 = vmatmul.mubr.bf16.gmra.mrb[0].mxu0 %v127
  %v232 = vpop.f32.mrb[0].mxu0
  %v233 = vadd.f32 0.0, %v232
  %v234 = vpop.f32.mrb[0].mxu0
  %v235 = vpop.f32.mrb[0].mxu0
  %v236 = vadd.f32 0.0, %v235
  %v237 = vpop.f32.mrb[0].mxu0
  %238 = vmatprep.mubr.bf16.mxu0 0
  %239 = vmatmul.mubr.bf16.gmra.mrb[0].mxu0 %v128
  %v240 = vpop.f32.mrb[0].mxu0
  %v241 = vadd.f32 0.0, %v240
  %v242 = vpop.f32.mrb[0].mxu0
  %v243 = vpop.f32.mrb[0].mxu0
  %v244 = vadd.f32 0.0, %v243
  %v245 = vpop.f32.mrb[0].mxu0
  %246 = vmatprep.mubr.bf16.mxu0 0
  %247 = vmatmul.mubr.bf16.gmra.mrb[0].mxu0 %v129
  %v248 = vpop.f32.mrb[0].mxu0
  %v249 = vadd.f32 0.0, %v248
  %v250 = vpop.f32.mrb[0].mxu0
  %v251 = vpop.f32.mrb[0].mxu0
  %v252 = vadd.f32 0.0, %v251
  %v253 = vpop.f32.mrb[0].mxu0
  %254 = vmatprep.mubr.bf16.mxu0 0
  %255 = vmatmul.mubr.bf16.gmra.mrb[0].mxu0 %v130
  %v256 = vpop.f32.mrb[0].mxu0
  %v257 = vadd.f32 0.0, %v256
  %v258 = vpop.f32.mrb[0].mxu0
  %v259 = vpop.f32.mrb[0].mxu0
  %v260 = vadd.f32 0.0, %v259
  %v261 = vpop.f32.mrb[0].mxu0
  %262 = vmatprep.mubr.bf16.mxu0 0
  %263 = vmatmul.mubr.bf16.gmra.mrb[0].mxu0 %v131
  %v264 = vpop.f32.mrb[0].mxu0
  %v265 = vadd.f32 0.0, %v264
  %v266 = vpop.f32.mrb[0].mxu0
  %v267 = vpop.f32.mrb[0].mxu0
  %v268 = vadd.f32 0.0, %v267
  %v269 = vpop.f32.mrb[0].mxu0
  %270 = vmatprep.mubr.bf16.mxu0 0
  %271 = vmatmul.mubr.bf16.gmra.mrb[0].mxu0 %v132
  %v272 = vpop.f32.mrb[0].mxu0
  %v273 = vadd.f32 0.0, %v272
  %v274 = vpop.f32.mrb[0].mxu0
  %v275 = vpop.f32.mrb[0].mxu0
  %v276 = vadd.f32 0.0, %v275
  %v277 = vpop.f32.mrb[0].mxu0
  %278 = vmatprep.mubr.bf16.mxu0 0
  %279 = vmatmul.mubr.bf16.gmra.mrb[0].mxu0 %v133
  %v280 = vpop.f32.mrb[0].mxu0
  %v281 = vadd.f32 0.0, %v280
  %v282 = vpop.f32.mrb[0].mxu0
  %v283 = vpop.f32.mrb[0].mxu0
  %v284 = vadd.f32 0.0, %v283
  %v285 = vpop.f32.mrb[0].mxu0
  %286 = vdwg.mxu0
  %v287 = vadd.f32 %v62, %v225
  %v288 = vadd.f32 %v63, %v228
  %v289 = vadd.f32 %v64, %v233
  %v290 = vadd.f32 %v65, %v236
  %v291 = vadd.f32 %v66, %v241
  %v292 = vadd.f32 %v67, %v244
  %v293 = vadd.f32 %v68, %v249
  %v294 = vadd.f32 %v69, %v252
  %v295 = vadd.f32 %v70, %v257
  %v296 = vadd.f32 %v71, %v260
  %v297 = vadd.f32 %v72, %v265
  %v298 = vadd.f32 %v73, %v268
  %v299 = vadd.f32 %v74, %v273
  %v300 = vadd.f32 %v75, %v276
  %v301 = vadd.f32 %v76, %v281
  %v302 = vadd.f32 %v77, %v284
  %303 = vst [vmem:[#allocation2] sm:$0xff] %v287
  %304 = vst [vmem:[#allocation2 + $0x8] sm:$0xff] %v288
  %305 = vst [vmem:[#allocation2 + $0x10] sm:$0xff] %v289
  %306 = vst [vmem:[#allocation2 + $0x18] sm:$0xff] %v290
  %307 = vst [vmem:[#allocation2 + $0x20] sm:$0xff] %v291
  %308 = vst [vmem:[#allocation2 + $0x28] sm:$0xff] %v292
  %309 = vst [vmem:[#allocation2 + $0x30] sm:$0xff] %v293
  %310 = vst [vmem:[#allocation2 + $0x38] sm:$0xff] %v294
  %311 = vst [vmem:[#allocation2 + $0x40] sm:$0xff] %v295
  %312 = vst [vmem:[#allocation2 + $0x48] sm:$0xff] %v296
  %313 = vst [vmem:[#allocation2 + $0x50] sm:$0xff] %v297
  %314 = vst [vmem:[#allocation2 + $0x58] sm:$0xff] %v298
  %315 = vst [vmem:[#allocation2 + $0x60] sm:$0xff] %v299
  %316 = vst [vmem:[#allocation2 + $0x68] sm:$0xff] %v300
  %317 = vst [vmem:[#allocation2 + $0x70] sm:$0xff] %v301
  %318 = vst [vmem:[#allocation2 + $0x78] sm:$0xff] %v302
  // Predicated region
  $region26: #{gcn_forward.2} parent=0 // pred_check
    %p319 = pneg %p21
  $region27: #{gcn_forward.2} parent=0 // pred_check_branch
    %321 = sbr.rel (%p319) target = $region29
  $region28: #{gcn_forward.2} parent=0 // pred_region
    %v322 = vld [vmem:[#allocation2] sm:$0xff]
    %v323 = vld [vmem:[#allocation2 + $0x8] sm:$0xff]
    %v324 = vld [vmem:[#allocation2 + $0x10] sm:$0xff]
    %v325 = vld [vmem:[#allocation2 + $0x18] sm:$0xff]
    %v326 = vld [vmem:[#allocation2 + $0x20] sm:$0xff]
    %v327 = vld [vmem:[#allocation2 + $0x28] sm:$0xff]
    %v328 = vld [vmem:[#allocation2 + $0x30] sm:$0xff]
    %v329 = vld [vmem:[#allocation2 + $0x38] sm:$0xff]
    %v330 = vld [vmem:[#allocation2 + $0x40] sm:$0xff]
    %v331 = vld [vmem:[#allocation2 + $0x48] sm:$0xff]
    %v332 = vld [vmem:[#allocation2 + $0x50] sm:$0xff]
    %v333 = vld [vmem:[#allocation2 + $0x58] sm:$0xff]
    %v334 = vld [vmem:[#allocation2 + $0x60] sm:$0xff]
    %v335 = vld [vmem:[#allocation2 + $0x68] sm:$0xff]
    %v336 = vld [vmem:[#allocation2 + $0x70] sm:$0xff]
    %v337 = vld [vmem:[#allocation2 + $0x78] sm:$0xff]
    %v338 = vld [vmem:[%s4] sm:$0xff]
    %v339 = vld [vmem:[%s4 + $0x8] sm:$0xff]
    %v340 = vld [vmem:[%s4 + $0x10] sm:$0xff]
    %v341 = vld [vmem:[%s4 + $0x18] sm:$0xff]
    %v342 = vld [vmem:[%s4 + $0x20] sm:$0xff]
    %v343 = vld [vmem:[%s4 + $0x28] sm:$0xff]
    %v344 = vld [vmem:[%s4 + $0x30] sm:$0xff]
    %v345 = vld [vmem:[%s4 + $0x38] sm:$0xff]
    %v346 = vld [vmem:[%s4 + $0x40] sm:$0xff]
    %v347 = vld [vmem:[%s4 + $0x48] sm:$0xff]
    %v348 = vld [vmem:[%s4 + $0x50] sm:$0xff]
    %v349 = vld [vmem:[%s4 + $0x58] sm:$0xff]
    %v350 = vld [vmem:[%s4 + $0x60] sm:$0xff]
    %v351 = vld [vmem:[%s4 + $0x68] sm:$0xff]
    %v352 = vld [vmem:[%s4 + $0x70] sm:$0xff]
    %v353 = vld [vmem:[%s4 + $0x78] sm:$0xff]
    %355 = vset.pattern.permute.xlu0 0
    %356 = vperm.xlu0 %355, %v338
    %v357 = vpop.permute.xlu0 %356
    %360 = vset.pattern.permute.xlu0 0
    %361 = vperm.xlu0 %360, %v339
    %v362 = vpop.permute.xlu0 %361
    %365 = vset.pattern.permute.xlu0 0
    %366 = vperm.xlu0 %365, %v340
    %v367 = vpop.permute.xlu0 %366
    %370 = vset.pattern.permute.xlu0 0
    %371 = vperm.xlu0 %370, %v341
    %v372 = vpop.permute.xlu0 %371
    %375 = vset.pattern.permute.xlu0 0
    %376 = vperm.xlu0 %375, %v342
    %v377 = vpop.permute.xlu0 %376
    %380 = vset.pattern.permute.xlu0 0
    %381 = vperm.xlu0 %380, %v343
    %v382 = vpop.permute.xlu0 %381
    %385 = vset.pattern.permute.xlu0 0
    %386 = vperm.xlu0 %385, %v344
    %v387 = vpop.permute.xlu0 %386
    %390 = vset.pattern.permute.xlu0 0
    %391 = vperm.xlu0 %390, %v345
    %v392 = vpop.permute.xlu0 %391
    %395 = vset.pattern.permute.xlu0 0
    %396 = vperm.xlu0 %395, %v346
    %v397 = vpop.permute.xlu0 %396
    %400 = vset.pattern.permute.xlu0 0
    %401 = vperm.xlu0 %400, %v347
    %v402 = vpop.permute.xlu0 %401
    %405 = vset.pattern.permute.xlu0 0
    %406 = vperm.xlu0 %405, %v348
    %v407 = vpop.permute.xlu0 %406
    %410 = vset.pattern.permute.xlu0 0
    %411 = vperm.xlu0 %410, %v349
    %v412 = vpop.permute.xlu0 %411
    %415 = vset.pattern.permute.xlu0 0
    %416 = vperm.xlu0 %415, %v350
    %v417 = vpop.permute.xlu0 %416
    %420 = vset.pattern.permute.xlu0 0
    %421 = vperm.xlu0 %420, %v351
    %v422 = vpop.permute.xlu0 %421
    %425 = vset.pattern.permute.xlu0 0
    %426 = vperm.xlu0 %425, %v352
    %v427 = vpop.permute.xlu0 %426
    %430 = vset.pattern.permute.xlu0 0
    %431 = vperm.xlu0 %430, %v353
    %v432 = vpop.permute.xlu0 %431
    %v434 = vmul.f32 %v322, %v357
    %v435 = vmul.f32 %v323, %v362
    %v436 = vmul.f32 %v324, %v367
    %v437 = vmul.f32 %v325, %v372
    %v438 = vmul.f32 %v326, %v377
    %v439 = vmul.f32 %v327, %v382
    %v440 = vmul.f32 %v328, %v387
    %v441 = vmul.f32 %v329, %v392
    %v442 = vmul.f32 %v330, %v397
    %v443 = vmul.f32 %v331, %v402
    %v444 = vmul.f32 %v332, %v407
    %v445 = vmul.f32 %v333, %v412
    %v446 = vmul.f32 %v334, %v417
    %v447 = vmul.f32 %v335, %v422
    %v448 = vmul.f32 %v336, %v427
    %v449 = vmul.f32 %v337, %v432
    %v450 = vpack.c.bf16 %v435, %v434
    %v451 = vpack.c.bf16 %v437, %v436
    %v452 = vpack.c.bf16 %v439, %v438
    %v453 = vpack.c.bf16 %v441, %v440
    %v454 = vpack.c.bf16 %v443, %v442
    %v455 = vpack.c.bf16 %v445, %v444
    %v456 = vpack.c.bf16 %v447, %v446
    %v457 = vpack.c.bf16 %v449, %v448
    %v458 = vld [vmem:[%s2] sm:$0xf]
    %v459 = vld [vmem:[%s2 + $0x4] sm:$0xf]
    %v460 = vld [vmem:[%s2 + $0x8] sm:$0xf]
    %v461 = vld [vmem:[%s2 + $0xc] sm:$0xf]
    %v462 = vld [vmem:[%s2 + $0x10] sm:$0xf]
    %v463 = vld [vmem:[%s2 + $0x14] sm:$0xf]
    %v464 = vld [vmem:[%s2 + $0x18] sm:$0xf]
    %v465 = vld [vmem:[%s2 + $0x1c] sm:$0xf]
    %v466 = vld [vmem:[%s2 + $0x20] sm:$0xf]
    %v467 = vld [vmem:[%s2 + $0x24] sm:$0xf]
    %v468 = vld [vmem:[%s2 + $0x28] sm:$0xf]
    %v469 = vld [vmem:[%s2 + $0x2c] sm:$0xf]
    %v470 = vld [vmem:[%s2 + $0x30] sm:$0xf]
    %v471 = vld [vmem:[%s2 + $0x34] sm:$0xf]
    %v472 = vld [vmem:[%s2 + $0x38] sm:$0xf]
    %v473 = vld [vmem:[%s2 + $0x3c] sm:$0xf]
    %v474 = vld [vmem:[%s3] sm:$0x1]
    %v476 = vlaneseq
    %v477 = vshrl.u32 %v476, 7
    %v478 = vsub.s32 0, %v477
    %v479 = vrot.slane %v474, %v478
    %v497 = vunpack.c.l.b16 %v458
    %v498 = vunpack.c.l.b16 %v459
    %v499 = vunpack.c.l.b16 %v460
    %v500 = vunpack.c.l.b16 %v461
    %v501 = vunpack.c.l.b16 %v462
    %v502 = vunpack.c.l.b16 %v463
    %v503 = vunpack.c.l.b16 %v464
    %v504 = vunpack.c.l.b16 %v465
    %v505 = vunpack.c.l.b16 %v466
    %v506 = vunpack.c.l.b16 %v467
    %v507 = vunpack.c.l.b16 %v468
    %v508 = vunpack.c.l.b16 %v469
    %v509 = vunpack.c.l.b16 %v470
    %v510 = vunpack.c.l.b16 %v471
    %v511 = vunpack.c.l.b16 %v472
    %v512 = vunpack.c.l.b16 %v473
    %v513 = vpack.c.b16 %v498, %v497
    %v514 = vpack.c.b16 %v500, %v499
    %v515 = vpack.c.b16 %v502, %v501
    %v516 = vpack.c.b16 %v504, %v503
    %v517 = vpack.c.b16 %v506, %v505
    %v518 = vpack.c.b16 %v508, %v507
    %v519 = vpack.c.b16 %v510, %v509
    %v520 = vpack.c.b16 %v512, %v511
    %529 = vmatprep.subr.bf16.mxu0 0
    %530 = vmatpush1.bf16.msra.mxu0 %v513
    %531 = vmatprep.subr.bf16.mxu0 0
    %532 = vmatpush1.bf16.msra.mxu0 %v514
    %533 = vmatprep.subr.bf16.mxu0 0
    %534 = vmatpush1.bf16.msra.mxu0 %v515
    %535 = vmatprep.subr.bf16.mxu0 0
    %536 = vmatpush1.bf16.msra.mxu0 %v516
    %537 = vmatprep.subr.bf16.mxu0 0
    %538 = vmatpush1.bf16.msra.mxu0 %v517
    %539 = vmatprep.subr.bf16.mxu0 0
    %540 = vmatpush1.bf16.msra.mxu0 %v518
    %541 = vmatprep.subr.bf16.mxu0 0
    %542 = vmatpush1.bf16.msra.mxu0 %v519
    %543 = vmatprep.subr.bf16.mxu0 0
    %544 = vmatpush1.bf16.msra.mxu0 %v520
    %545 = vmatprep.subr.bf16.mxu0 0
    %546 = vmatpush1.bf16.msra.mxu0 0
    %547 = vmatprep.subr.bf16.mxu0 0
    %548 = vmatpush1.bf16.msra.mxu0 0
    %549 = vmatprep.subr.bf16.mxu0 0
    %550 = vmatpush1.bf16.msra.mxu0 0
    %551 = vmatprep.subr.bf16.mxu0 0
    %552 = vmatpush1.bf16.msra.mxu0 0
    %553 = vmatprep.subr.bf16.mxu0 0
    %554 = vmatpush1.bf16.msra.mxu0 0
    %555 = vmatprep.subr.bf16.mxu0 0
    %556 = vmatpush1.bf16.msra.mxu0 0
    %557 = vmatprep.subr.bf16.mxu0 0
    %558 = vmatpush1.bf16.msra.mxu0 0
    %559 = vmatprep.subr.bf16.mxu0 0
    %560 = vmatpush1.bf16.msra.mxu0 0
    %561 = vmatprep.mubr.bf16.mxu0 0
    %562 = vmatmul.mubr.bf16.gmra.mrb[0].mxu0 %v450
    %v563 = vpop.f32.mrb[0].mxu0
    %v564 = vadd.f32 %v479, %v563
    %v565 = vpop.f32.mrb[0].mxu0
    %v566 = vpop.f32.mrb[0].mxu0
    %v567 = vadd.f32 %v479, %v566
    %v568 = vpop.f32.mrb[0].mxu0
    %569 = vmatprep.mubr.bf16.mxu0 0
    %570 = vmatmul.mubr.bf16.gmra.mrb[0].mxu0 %v451
    %v571 = vpop.f32.mrb[0].mxu0
    %v572 = vadd.f32 %v479, %v571
    %v573 = vpop.f32.mrb[0].mxu0
    %v574 = vpop.f32.mrb[0].mxu0
    %v575 = vadd.f32 %v479, %v574
    %v576 = vpop.f32.mrb[0].mxu0
    %577 = vmatprep.mubr.bf16.mxu0 0
    %578 = vmatmul.mubr.bf16.gmra.mrb[0].mxu0 %v452
    %v579 = vpop.f32.mrb[0].mxu0
    %v580 = vadd.f32 %v479, %v579
    %v581 = vpop.f32.mrb[0].mxu0
    %v582 = vpop.f32.mrb[0].mxu0
    %v583 = vadd.f32 %v479, %v582
    %v584 = vpop.f32.mrb[0].mxu0
    %585 = vmatprep.mubr.bf16.mxu0 0
    %586 = vmatmul.mubr.bf16.gmra.mrb[0].mxu0 %v453
    %v587 = vpop.f32.mrb[0].mxu0
    %v588 = vadd.f32 %v479, %v587
    %v589 = vpop.f32.mrb[0].mxu0
    %v590 = vpop.f32.mrb[0].mxu0
    %v591 = vadd.f32 %v479, %v590
    %v592 = vpop.f32.mrb[0].mxu0
    %593 = vmatprep.mubr.bf16.mxu0 0
    %594 = vmatmul.mubr.bf16.gmra.mrb[0].mxu0 %v454
    %v595 = vpop.f32.mrb[0].mxu0
    %v596 = vadd.f32 %v479, %v595
    %v597 = vpop.f32.mrb[0].mxu0
    %v598 = vpop.f32.mrb[0].mxu0
    %v599 = vadd.f32 %v479, %v598
    %v600 = vpop.f32.mrb[0].mxu0
    %601 = vmatprep.mubr.bf16.mxu0 0
    %602 = vmatmul.mubr.bf16.gmra.mrb[0].mxu0 %v455
    %v603 = vpop.f32.mrb[0].mxu0
    %v604 = vadd.f32 %v479, %v603
    %v605 = vpop.f32.mrb[0].mxu0
    %v606 = vpop.f32.mrb[0].mxu0
    %v607 = vadd.f32 %v479, %v606
    %v608 = vpop.f32.mrb[0].mxu0
    %609 = vmatprep.mubr.bf16.mxu0 0
    %610 = vmatmul.mubr.bf16.gmra.mrb[0].mxu0 %v456
    %v611 = vpop.f32.mrb[0].mxu0
    %v612 = vadd.f32 %v479, %v611
    %v613 = vpop.f32.mrb[0].mxu0
    %v614 = vpop.f32.mrb[0].mxu0
    %v615 = vadd.f32 %v479, %v614
    %v616 = vpop.f32.mrb[0].mxu0
    %617 = vmatprep.mubr.bf16.mxu0 0
    %618 = vmatmul.mubr.bf16.gmra.mrb[0].mxu0 %v457
    %v619 = vpop.f32.mrb[0].mxu0
    %v620 = vadd.f32 %v479, %v619
    %v621 = vpop.f32.mrb[0].mxu0
    %v622 = vpop.f32.mrb[0].mxu0
    %v623 = vadd.f32 %v479, %v622
    %v624 = vpop.f32.mrb[0].mxu0
    %625 = vdwg.mxu0
    %v626 = vmax.f32 %v564, 0.0
    %v627 = vmax.f32 %v567, 0.0
    %v628 = vmax.f32 %v572, 0.0
    %v629 = vmax.f32 %v575, 0.0
    %v630 = vmax.f32 %v580, 0.0
    %v631 = vmax.f32 %v583, 0.0
    %v632 = vmax.f32 %v588, 0.0
    %v633 = vmax.f32 %v591, 0.0
    %v634 = vmax.f32 %v596, 0.0
    %v635 = vmax.f32 %v599, 0.0
    %v636 = vmax.f32 %v604, 0.0
    %v637 = vmax.f32 %v607, 0.0
    %v638 = vmax.f32 %v612, 0.0
    %v639 = vmax.f32 %v615, 0.0
    %v640 = vmax.f32 %v620, 0.0
    %v641 = vmax.f32 %v623, 0.0
    %v642 = vpack.c.bf16 %v627, %v626
    %v643 = vpack.c.bf16 %v629, %v628
    %v644 = vpack.c.bf16 %v631, %v630
    %v645 = vpack.c.bf16 %v633, %v632
    %v646 = vpack.c.bf16 %v635, %v634
    %v647 = vpack.c.bf16 %v637, %v636
    %v648 = vpack.c.bf16 %v639, %v638
    %v649 = vpack.c.bf16 %v641, %v640
    %v658 = vunpack.c.l.b16 %v642
    %v659 = vunpack.c.h.b16 %v642
    %v660 = vunpack.c.l.b16 %v643
    %v661 = vunpack.c.h.b16 %v643
    %v662 = vunpack.c.l.b16 %v644
    %v663 = vunpack.c.h.b16 %v644
    %v664 = vunpack.c.l.b16 %v645
    %v665 = vunpack.c.h.b16 %v645
    %v666 = vunpack.c.l.b16 %v646
    %v667 = vunpack.c.h.b16 %v646
    %v668 = vunpack.c.l.b16 %v647
    %v669 = vunpack.c.h.b16 %v647
    %v670 = vunpack.c.l.b16 %v648
    %v671 = vunpack.c.h.b16 %v648
    %v672 = vunpack.c.l.b16 %v649
    %v673 = vunpack.c.h.b16 %v649
    %v674 = vpack.c.b16 %v658, %v658
    %v675 = vpack.c.b16 %v659, %v659
    %v676 = vpack.c.b16 %v660, %v660
    %v677 = vpack.c.b16 %v661, %v661
    %v678 = vpack.c.b16 %v662, %v662
    %v679 = vpack.c.b16 %v663, %v663
    %v680 = vpack.c.b16 %v664, %v664
    %v681 = vpack.c.b16 %v665, %v665
    %v682 = vpack.c.b16 %v666, %v666
    %v683 = vpack.c.b16 %v667, %v667
    %v684 = vpack.c.b16 %v668, %v668
    %v685 = vpack.c.b16 %v669, %v669
    %v686 = vpack.c.b16 %v670, %v670
    %v687 = vpack.c.b16 %v671, %v671
    %v688 = vpack.c.b16 %v672, %v672
    %v689 = vpack.c.b16 %v673, %v673
    %706 = vst [vmem:[%s5] sm:$0xf] %v674
    %707 = vst [vmem:[%s5 + $0x4] sm:$0xf] %v675
    %708 = vst [vmem:[%s5 + $0x8] sm:$0xf] %v676
    %709 = vst [vmem:[%s5 + $0xc] sm:$0xf] %v677
    %710 = vst [vmem:[%s5 + $0x10] sm:$0xf] %v678
    %711 = vst [vmem:[%s5 + $0x14] sm:$0xf] %v679
    %712 = vst [vmem:[%s5 + $0x18] sm:$0xf] %v680
    %713 = vst [vmem:[%s5 + $0x1c] sm:$0xf] %v681
    %714 = vst [vmem:[%s5 + $0x20] sm:$0xf] %v682
    %715 = vst [vmem:[%s5 + $0x24] sm:$0xf] %v683
    %716 = vst [vmem:[%s5 + $0x28] sm:$0xf] %v684
    %717 = vst [vmem:[%s5 + $0x2c] sm:$0xf] %v685
    %718 = vst [vmem:[%s5 + $0x30] sm:$0xf] %v686
    %719 = vst [vmem:[%s5 + $0x34] sm:$0xf] %v687
    %720 = vst [vmem:[%s5 + $0x38] sm:$0xf] %v688
    %721 = vst [vmem:[%s5 + $0x3c] sm:$0xf] %v689
  $region29: #{gcn_forward.2} parent=0 // pred_fallthru
    _
  // Predicated region
  $region30: #{gcn_forward.2} parent=0 // pred_check
    _
  $region31: #{gcn_forward.2} parent=0 // pred_check_branch
    %723 = sbr.rel (0) target = $region33
  $region32: #{gcn_forward.2} parent=0 // pred_region
    _
  $region33: #{gcn_forward.2} parent=0 // pred_fallthru
    _
  // Predicated region
  $region34: #{gcn_forward.2} parent=0 // pred_check
    _
  $region35: #{gcn_forward.2} parent=0 // pred_check_branch
    %725 = sbr.rel (0) target = $region37
  $region36: #{gcn_forward.2} parent=0 // pred_region
    _
  $region37: #{gcn_forward.2} parent=0 // pred_fallthru
    _

// kernel: gcn_forward.3
$region0: #{gcn_forward.3}
  #allocation0 [shape = 'u32[]', space=smem, size = 0x4, offset = 0x4, fixed_abs, tag = 'smem constant byte address 0x4 - core index']
  #allocation1 [shape = 'u32[144,128]{1,0:T(1,128)}', space=vmem, size = 0x12000, scoped, tag = 'internal scratch']
  #allocation2 [shape = 'f32[128,128]{1,0:T(8,128)}', space=vmem, size = 0x10000, scoped, tag = 'scratch operand']
  %s0 = inlined_call_operand.vmem [shape: bf16[128,128], index: 0, kind: input, shape index: {}]
  %s1 = inlined_call_operand.vmem [shape: bf16[128,128], index: 1, kind: input, shape index: {}]
  %s2 = inlined_call_operand.vmem [shape: bf16[128,128], index: 2, kind: input, shape index: {}]
  %s3 = inlined_call_operand.vmem [shape: f32[1,128], index: 3, kind: input, shape index: {}]
  %s4 = inlined_call_operand.vmem [shape: f32[128,1], index: 4, kind: input, shape index: {}]
  %s5 = inlined_call_operand.vmem [shape: f32[128,128], index: 5, kind: output, shape index: {}]
  %s6 = sld [smem:[#allocation0]]
  $region38: #{gcn_forward.3} parent=0
    _
  %s8 = ssub.s32 1, %s6
  %s9 = scalar_select 0, %s8, %s6
  // Predicated region
  $region2: #{gcn_forward.3} parent=0 // pred_check
    _
  $region3: #{gcn_forward.3} parent=0 // pred_check_branch
    %11 = sbr.rel (0) target = $region5
  $region4: #{gcn_forward.3} parent=0 // pred_region
    _
  $region5: #{gcn_forward.3} parent=0 // pred_fallthru
    _
  // Predicated region
  $region6: #{gcn_forward.3} parent=0 // pred_check
    _
  $region7: #{gcn_forward.3} parent=0 // pred_check_branch
    %13 = sbr.rel (0) target = $region9
  $region8: #{gcn_forward.3} parent=0 // pred_region
    _
  $region9: #{gcn_forward.3} parent=0 // pred_fallthru
    _
  // Predicated region
  $region10: #{gcn_forward.3} parent=0 // pred_check
    _
  $region11: #{gcn_forward.3} parent=0 // pred_check_branch
    %15 = sbr.rel (0) target = $region13
  $region12: #{gcn_forward.3} parent=0 // pred_region
    _
  $region13: #{gcn_forward.3} parent=0 // pred_fallthru
    _
  // Predicated region
  $region14: #{gcn_forward.3} parent=0 // pred_check
    _
  $region15: #{gcn_forward.3} parent=0 // pred_check_branch
    %17 = sbr.rel (0) target = $region17
  $region16: #{gcn_forward.3} parent=0 // pred_region
    _
  $region17: #{gcn_forward.3} parent=0 // pred_fallthru
    _
  // Predicated region
  $region18: #{gcn_forward.3} parent=0 // pred_check
    _
  $region19: #{gcn_forward.3} parent=0 // pred_check_branch
    %19 = sbr.rel (0) target = $region21
  $region20: #{gcn_forward.3} parent=0 // pred_region
    _
  $region21: #{gcn_forward.3} parent=0 // pred_fallthru
    _
  %p21 = scmp.eq.s32.totalorder 0, 0
  // Predicated region
  $region22: #{gcn_forward.3} parent=0 // pred_check
    %p22 = pneg %p21
  $region23: #{gcn_forward.3} parent=0 // pred_check_branch
    %24 = sbr.rel (%p22) target = $region25
  $region24: #{gcn_forward.3} parent=0 // pred_region
    %25 = vst [vmem:[#allocation2] sm:$0xff] 0.0
    %26 = vst [vmem:[#allocation2 + $0x8] sm:$0xff] 0.0
    %27 = vst [vmem:[#allocation2 + $0x10] sm:$0xff] 0.0
    %28 = vst [vmem:[#allocation2 + $0x18] sm:$0xff] 0.0
    %29 = vst [vmem:[#allocation2 + $0x20] sm:$0xff] 0.0
    %30 = vst [vmem:[#allocation2 + $0x28] sm:$0xff] 0.0
    %31 = vst [vmem:[#allocation2 + $0x30] sm:$0xff] 0.0
    %32 = vst [vmem:[#allocation2 + $0x38] sm:$0xff] 0.0
    %33 = vst [vmem:[#allocation2 + $0x40] sm:$0xff] 0.0
    %34 = vst [vmem:[#allocation2 + $0x48] sm:$0xff] 0.0
    %35 = vst [vmem:[#allocation2 + $0x50] sm:$0xff] 0.0
    %36 = vst [vmem:[#allocation2 + $0x58] sm:$0xff] 0.0
    %37 = vst [vmem:[#allocation2 + $0x60] sm:$0xff] 0.0
    %38 = vst [vmem:[#allocation2 + $0x68] sm:$0xff] 0.0
    %39 = vst [vmem:[#allocation2 + $0x70] sm:$0xff] 0.0
    %40 = vst [vmem:[#allocation2 + $0x78] sm:$0xff] 0.0
  $region25: #{gcn_forward.3} parent=0 // pred_fallthru
    _
  %s41 = smul.u32 0, 128
  %s42 = sshra.s32 %s41, 3
  %s43 = sand.u32 %s41, 7
  %s44 = smul.addr %s42, 4
  %s45 = scalar_lea.vmem %s1, %s44
  %v46 = vld [vmem:[%s45] sm:$0xf]
  %v47 = vld [vmem:[%s45 + $0x4] sm:$0xf]
  %v48 = vld [vmem:[%s45 + $0x8] sm:$0xf]
  %v49 = vld [vmem:[%s45 + $0xc] sm:$0xf]
  %v50 = vld [vmem:[%s45 + $0x10] sm:$0xf]
  %v51 = vld [vmem:[%s45 + $0x14] sm:$0xf]
  %v52 = vld [vmem:[%s45 + $0x18] sm:$0xf]
  %v53 = vld [vmem:[%s45 + $0x1c] sm:$0xf]
  %v54 = vld [vmem:[%s45 + $0x20] sm:$0xf]
  %v55 = vld [vmem:[%s45 + $0x24] sm:$0xf]
  %v56 = vld [vmem:[%s45 + $0x28] sm:$0xf]
  %v57 = vld [vmem:[%s45 + $0x2c] sm:$0xf]
  %v58 = vld [vmem:[%s45 + $0x30] sm:$0xf]
  %v59 = vld [vmem:[%s45 + $0x34] sm:$0xf]
  %v60 = vld [vmem:[%s45 + $0x38] sm:$0xf]
  %v61 = vld [vmem:[%s45 + $0x3c] sm:$0xf]
  %v62 = vld [vmem:[#allocation2] sm:$0xff]
  %v63 = vld [vmem:[#allocation2 + $0x8] sm:$0xff]
  %v64 = vld [vmem:[#allocation2 + $0x10] sm:$0xff]
  %v65 = vld [vmem:[#allocation2 + $0x18] sm:$0xff]
  %v66 = vld [vmem:[#allocation2 + $0x20] sm:$0xff]
  %v67 = vld [vmem:[#allocation2 + $0x28] sm:$0xff]
  %v68 = vld [vmem:[#allocation2 + $0x30] sm:$0xff]
  %v69 = vld [vmem:[#allocation2 + $0x38] sm:$0xff]
  %v70 = vld [vmem:[#allocation2 + $0x40] sm:$0xff]
  %v71 = vld [vmem:[#allocation2 + $0x48] sm:$0xff]
  %v72 = vld [vmem:[#allocation2 + $0x50] sm:$0xff]
  %v73 = vld [vmem:[#allocation2 + $0x58] sm:$0xff]
  %v74 = vld [vmem:[#allocation2 + $0x60] sm:$0xff]
  %v75 = vld [vmem:[#allocation2 + $0x68] sm:$0xff]
  %v76 = vld [vmem:[#allocation2 + $0x70] sm:$0xff]
  %v77 = vld [vmem:[#allocation2 + $0x78] sm:$0xff]
  %v78 = vld [vmem:[%s0] sm:$0xf]
  %v79 = vld [vmem:[%s0 + $0x4] sm:$0xf]
  %v80 = vld [vmem:[%s0 + $0x8] sm:$0xf]
  %v81 = vld [vmem:[%s0 + $0xc] sm:$0xf]
  %v82 = vld [vmem:[%s0 + $0x10] sm:$0xf]
  %v83 = vld [vmem:[%s0 + $0x14] sm:$0xf]
  %v84 = vld [vmem:[%s0 + $0x18] sm:$0xf]
  %v85 = vld [vmem:[%s0 + $0x1c] sm:$0xf]
  %v86 = vld [vmem:[%s0 + $0x20] sm:$0xf]
  %v87 = vld [vmem:[%s0 + $0x24] sm:$0xf]
  %v88 = vld [vmem:[%s0 + $0x28] sm:$0xf]
  %v89 = vld [vmem:[%s0 + $0x2c] sm:$0xf]
  %v90 = vld [vmem:[%s0 + $0x30] sm:$0xf]
  %v91 = vld [vmem:[%s0 + $0x34] sm:$0xf]
  %v92 = vld [vmem:[%s0 + $0x38] sm:$0xf]
  %v93 = vld [vmem:[%s0 + $0x3c] sm:$0xf]
  %v110 = vunpack.c.l.b16 %v78
  %v111 = vunpack.c.l.b16 %v79
  %v112 = vunpack.c.l.b16 %v80
  %v113 = vunpack.c.l.b16 %v81
  %v114 = vunpack.c.l.b16 %v82
  %v115 = vunpack.c.l.b16 %v83
  %v116 = vunpack.c.l.b16 %v84
  %v117 = vunpack.c.l.b16 %v85
  %v118 = vunpack.c.l.b16 %v86
  %v119 = vunpack.c.l.b16 %v87
  %v120 = vunpack.c.l.b16 %v88
  %v121 = vunpack.c.l.b16 %v89
  %v122 = vunpack.c.l.b16 %v90
  %v123 = vunpack.c.l.b16 %v91
  %v124 = vunpack.c.l.b16 %v92
  %v125 = vunpack.c.l.b16 %v93
  %v126 = vpack.c.b16 %v111, %v110
  %v127 = vpack.c.b16 %v113, %v112
  %v128 = vpack.c.b16 %v115, %v114
  %v129 = vpack.c.b16 %v117, %v116
  %v130 = vpack.c.b16 %v119, %v118
  %v131 = vpack.c.b16 %v121, %v120
  %v132 = vpack.c.b16 %v123, %v122
  %v133 = vpack.c.b16 %v125, %v124
  %v158 = vunpack.c.l.b16 %v46
  %v159 = vunpack.c.l.b16 %v47
  %v160 = vunpack.c.l.b16 %v48
  %v161 = vunpack.c.l.b16 %v49
  %v162 = vunpack.c.l.b16 %v50
  %v163 = vunpack.c.l.b16 %v51
  %v164 = vunpack.c.l.b16 %v52
  %v165 = vunpack.c.l.b16 %v53
  %v166 = vunpack.c.l.b16 %v54
  %v167 = vunpack.c.l.b16 %v55
  %v168 = vunpack.c.l.b16 %v56
  %v169 = vunpack.c.l.b16 %v57
  %v170 = vunpack.c.l.b16 %v58
  %v171 = vunpack.c.l.b16 %v59
  %v172 = vunpack.c.l.b16 %v60
  %v173 = vunpack.c.l.b16 %v61
  %v174 = vpack.c.b16 %v159, %v158
  %v175 = vpack.c.b16 %v161, %v160
  %v176 = vpack.c.b16 %v163, %v162
  %v177 = vpack.c.b16 %v165, %v164
  %v178 = vpack.c.b16 %v167, %v166
  %v179 = vpack.c.b16 %v169, %v168
  %v180 = vpack.c.b16 %v171, %v170
  %v181 = vpack.c.b16 %v173, %v172
  %190 = vmatprep.subr.bf16.mxu0 0
  %191 = vmatpush1.bf16.msra.mxu0 %v174
  %192 = vmatprep.subr.bf16.mxu0 0
  %193 = vmatpush1.bf16.msra.mxu0 %v175
  %194 = vmatprep.subr.bf16.mxu0 0
  %195 = vmatpush1.bf16.msra.mxu0 %v176
  %196 = vmatprep.subr.bf16.mxu0 0
  %197 = vmatpush1.bf16.msra.mxu0 %v177
  %198 = vmatprep.subr.bf16.mxu0 0
  %199 = vmatpush1.bf16.msra.mxu0 %v178
  %200 = vmatprep.subr.bf16.mxu0 0
  %201 = vmatpush1.bf16.msra.mxu0 %v179
  %202 = vmatprep.subr.bf16.mxu0 0
  %203 = vmatpush1.bf16.msra.mxu0 %v180
  %204 = vmatprep.subr.bf16.mxu0 0
  %205 = vmatpush1.bf16.msra.mxu0 %v181
  %206 = vmatprep.subr.bf16.mxu0 0
  %207 = vmatpush1.bf16.msra.mxu0 0
  %208 = vmatprep.subr.bf16.mxu0 0
  %209 = vmatpush1.bf16.msra.mxu0 0
  %210 = vmatprep.subr.bf16.mxu0 0
  %211 = vmatpush1.bf16.msra.mxu0 0
  %212 = vmatprep.subr.bf16.mxu0 0
  %213 = vmatpush1.bf16.msra.mxu0 0
  %214 = vmatprep.subr.bf16.mxu0 0
  %215 = vmatpush1.bf16.msra.mxu0 0
  %216 = vmatprep.subr.bf16.mxu0 0
  %217 = vmatpush1.bf16.msra.mxu0 0
  %218 = vmatprep.subr.bf16.mxu0 0
  %219 = vmatpush1.bf16.msra.mxu0 0
  %220 = vmatprep.subr.bf16.mxu0 0
  %221 = vmatpush1.bf16.msra.mxu0 0
  %222 = vmatprep.mubr.bf16.mxu0 0
  %223 = vmatmul.mubr.bf16.gmra.mrb[0].mxu0 %v126
  %v224 = vpop.f32.mrb[0].mxu0
  %v225 = vadd.f32 0.0, %v224
  %v226 = vpop.f32.mrb[0].mxu0
  %v227 = vpop.f32.mrb[0].mxu0
  %v228 = vadd.f32 0.0, %v227
  %v229 = vpop.f32.mrb[0].mxu0
  %230 = vmatprep.mubr.bf16.mxu0 0
  %231 = vmatmul.mubr.bf16.gmra.mrb[0].mxu0 %v127
  %v232 = vpop.f32.mrb[0].mxu0
  %v233 = vadd.f32 0.0, %v232
  %v234 = vpop.f32.mrb[0].mxu0
  %v235 = vpop.f32.mrb[0].mxu0
  %v236 = vadd.f32 0.0, %v235
  %v237 = vpop.f32.mrb[0].mxu0
  %238 = vmatprep.mubr.bf16.mxu0 0
  %239 = vmatmul.mubr.bf16.gmra.mrb[0].mxu0 %v128
  %v240 = vpop.f32.mrb[0].mxu0
  %v241 = vadd.f32 0.0, %v240
  %v242 = vpop.f32.mrb[0].mxu0
  %v243 = vpop.f32.mrb[0].mxu0
  %v244 = vadd.f32 0.0, %v243
  %v245 = vpop.f32.mrb[0].mxu0
  %246 = vmatprep.mubr.bf16.mxu0 0
  %247 = vmatmul.mubr.bf16.gmra.mrb[0].mxu0 %v129
  %v248 = vpop.f32.mrb[0].mxu0
  %v249 = vadd.f32 0.0, %v248
  %v250 = vpop.f32.mrb[0].mxu0
  %v251 = vpop.f32.mrb[0].mxu0
  %v252 = vadd.f32 0.0, %v251
  %v253 = vpop.f32.mrb[0].mxu0
  %254 = vmatprep.mubr.bf16.mxu0 0
  %255 = vmatmul.mubr.bf16.gmra.mrb[0].mxu0 %v130
  %v256 = vpop.f32.mrb[0].mxu0
  %v257 = vadd.f32 0.0, %v256
  %v258 = vpop.f32.mrb[0].mxu0
  %v259 = vpop.f32.mrb[0].mxu0
  %v260 = vadd.f32 0.0, %v259
  %v261 = vpop.f32.mrb[0].mxu0
  %262 = vmatprep.mubr.bf16.mxu0 0
  %263 = vmatmul.mubr.bf16.gmra.mrb[0].mxu0 %v131
  %v264 = vpop.f32.mrb[0].mxu0
  %v265 = vadd.f32 0.0, %v264
  %v266 = vpop.f32.mrb[0].mxu0
  %v267 = vpop.f32.mrb[0].mxu0
  %v268 = vadd.f32 0.0, %v267
  %v269 = vpop.f32.mrb[0].mxu0
  %270 = vmatprep.mubr.bf16.mxu0 0
  %271 = vmatmul.mubr.bf16.gmra.mrb[0].mxu0 %v132
  %v272 = vpop.f32.mrb[0].mxu0
  %v273 = vadd.f32 0.0, %v272
  %v274 = vpop.f32.mrb[0].mxu0
  %v275 = vpop.f32.mrb[0].mxu0
  %v276 = vadd.f32 0.0, %v275
  %v277 = vpop.f32.mrb[0].mxu0
  %278 = vmatprep.mubr.bf16.mxu0 0
  %279 = vmatmul.mubr.bf16.gmra.mrb[0].mxu0 %v133
  %v280 = vpop.f32.mrb[0].mxu0
  %v281 = vadd.f32 0.0, %v280
  %v282 = vpop.f32.mrb[0].mxu0
  %v283 = vpop.f32.mrb[0].mxu0
  %v284 = vadd.f32 0.0, %v283
  %v285 = vpop.f32.mrb[0].mxu0
  %286 = vdwg.mxu0
  %v287 = vadd.f32 %v62, %v225
  %v288 = vadd.f32 %v63, %v228
  %v289 = vadd.f32 %v64, %v233
  %v290 = vadd.f32 %v65, %v236
  %v291 = vadd.f32 %v66, %v241
  %v292 = vadd.f32 %v67, %v244
  %v293 = vadd.f32 %v68, %v249
  %v294 = vadd.f32 %v69, %v252
  %v295 = vadd.f32 %v70, %v257
  %v296 = vadd.f32 %v71, %v260
  %v297 = vadd.f32 %v72, %v265
  %v298 = vadd.f32 %v73, %v268
  %v299 = vadd.f32 %v74, %v273
  %v300 = vadd.f32 %v75, %v276
  %v301 = vadd.f32 %v76, %v281
  %v302 = vadd.f32 %v77, %v284
  %303 = vst [vmem:[#allocation2] sm:$0xff] %v287
  %304 = vst [vmem:[#allocation2 + $0x8] sm:$0xff] %v288
  %305 = vst [vmem:[#allocation2 + $0x10] sm:$0xff] %v289
  %306 = vst [vmem:[#allocation2 + $0x18] sm:$0xff] %v290
  %307 = vst [vmem:[#allocation2 + $0x20] sm:$0xff] %v291
  %308 = vst [vmem:[#allocation2 + $0x28] sm:$0xff] %v292
  %309 = vst [vmem:[#allocation2 + $0x30] sm:$0xff] %v293
  %310 = vst [vmem:[#allocation2 + $0x38] sm:$0xff] %v294
  %311 = vst [vmem:[#allocation2 + $0x40] sm:$0xff] %v295
  %312 = vst [vmem:[#allocation2 + $0x48] sm:$0xff] %v296
  %313 = vst [vmem:[#allocation2 + $0x50] sm:$0xff] %v297
  %314 = vst [vmem:[#allocation2 + $0x58] sm:$0xff] %v298
  %315 = vst [vmem:[#allocation2 + $0x60] sm:$0xff] %v299
  %316 = vst [vmem:[#allocation2 + $0x68] sm:$0xff] %v300
  %317 = vst [vmem:[#allocation2 + $0x70] sm:$0xff] %v301
  %318 = vst [vmem:[#allocation2 + $0x78] sm:$0xff] %v302
  // Predicated region
  $region26: #{gcn_forward.3} parent=0 // pred_check
    %p319 = pneg %p21
  $region27: #{gcn_forward.3} parent=0 // pred_check_branch
    %321 = sbr.rel (%p319) target = $region29
  $region28: #{gcn_forward.3} parent=0 // pred_region
    %v322 = vld [vmem:[#allocation2] sm:$0xff]
    %v323 = vld [vmem:[#allocation2 + $0x8] sm:$0xff]
    %v324 = vld [vmem:[#allocation2 + $0x10] sm:$0xff]
    %v325 = vld [vmem:[#allocation2 + $0x18] sm:$0xff]
    %v326 = vld [vmem:[#allocation2 + $0x20] sm:$0xff]
    %v327 = vld [vmem:[#allocation2 + $0x28] sm:$0xff]
    %v328 = vld [vmem:[#allocation2 + $0x30] sm:$0xff]
    %v329 = vld [vmem:[#allocation2 + $0x38] sm:$0xff]
    %v330 = vld [vmem:[#allocation2 + $0x40] sm:$0xff]
    %v331 = vld [vmem:[#allocation2 + $0x48] sm:$0xff]
    %v332 = vld [vmem:[#allocation2 + $0x50] sm:$0xff]
    %v333 = vld [vmem:[#allocation2 + $0x58] sm:$0xff]
    %v334 = vld [vmem:[#allocation2 + $0x60] sm:$0xff]
    %v335 = vld [vmem:[#allocation2 + $0x68] sm:$0xff]
    %v336 = vld [vmem:[#allocation2 + $0x70] sm:$0xff]
    %v337 = vld [vmem:[#allocation2 + $0x78] sm:$0xff]
    %v338 = vld [vmem:[%s4] sm:$0xff]
    %v339 = vld [vmem:[%s4 + $0x8] sm:$0xff]
    %v340 = vld [vmem:[%s4 + $0x10] sm:$0xff]
    %v341 = vld [vmem:[%s4 + $0x18] sm:$0xff]
    %v342 = vld [vmem:[%s4 + $0x20] sm:$0xff]
    %v343 = vld [vmem:[%s4 + $0x28] sm:$0xff]
    %v344 = vld [vmem:[%s4 + $0x30] sm:$0xff]
    %v345 = vld [vmem:[%s4 + $0x38] sm:$0xff]
    %v346 = vld [vmem:[%s4 + $0x40] sm:$0xff]
    %v347 = vld [vmem:[%s4 + $0x48] sm:$0xff]
    %v348 = vld [vmem:[%s4 + $0x50] sm:$0xff]
    %v349 = vld [vmem:[%s4 + $0x58] sm:$0xff]
    %v350 = vld [vmem:[%s4 + $0x60] sm:$0xff]
    %v351 = vld [vmem:[%s4 + $0x68] sm:$0xff]
    %v352 = vld [vmem:[%s4 + $0x70] sm:$0xff]
    %v353 = vld [vmem:[%s4 + $0x78] sm:$0xff]
    %355 = vset.pattern.permute.xlu0 0
    %356 = vperm.xlu0 %355, %v338
    %v357 = vpop.permute.xlu0 %356
    %360 = vset.pattern.permute.xlu0 0
    %361 = vperm.xlu0 %360, %v339
    %v362 = vpop.permute.xlu0 %361
    %365 = vset.pattern.permute.xlu0 0
    %366 = vperm.xlu0 %365, %v340
    %v367 = vpop.permute.xlu0 %366
    %370 = vset.pattern.permute.xlu0 0
    %371 = vperm.xlu0 %370, %v341
    %v372 = vpop.permute.xlu0 %371
    %375 = vset.pattern.permute.xlu0 0
    %376 = vperm.xlu0 %375, %v342
    %v377 = vpop.permute.xlu0 %376
    %380 = vset.pattern.permute.xlu0 0
    %381 = vperm.xlu0 %380, %v343
    %v382 = vpop.permute.xlu0 %381
    %385 = vset.pattern.permute.xlu0 0
    %386 = vperm.xlu0 %385, %v344
    %v387 = vpop.permute.xlu0 %386
    %390 = vset.pattern.permute.xlu0 0
    %391 = vperm.xlu0 %390, %v345
    %v392 = vpop.permute.xlu0 %391
    %395 = vset.pattern.permute.xlu0 0
    %396 = vperm.xlu0 %395, %v346
    %v397 = vpop.permute.xlu0 %396
    %400 = vset.pattern.permute.xlu0 0
    %401 = vperm.xlu0 %400, %v347
    %v402 = vpop.permute.xlu0 %401
    %405 = vset.pattern.permute.xlu0 0
    %406 = vperm.xlu0 %405, %v348
    %v407 = vpop.permute.xlu0 %406
    %410 = vset.pattern.permute.xlu0 0
    %411 = vperm.xlu0 %410, %v349
    %v412 = vpop.permute.xlu0 %411
    %415 = vset.pattern.permute.xlu0 0
    %416 = vperm.xlu0 %415, %v350
    %v417 = vpop.permute.xlu0 %416
    %420 = vset.pattern.permute.xlu0 0
    %421 = vperm.xlu0 %420, %v351
    %v422 = vpop.permute.xlu0 %421
    %425 = vset.pattern.permute.xlu0 0
    %426 = vperm.xlu0 %425, %v352
    %v427 = vpop.permute.xlu0 %426
    %430 = vset.pattern.permute.xlu0 0
    %431 = vperm.xlu0 %430, %v353
    %v432 = vpop.permute.xlu0 %431
    %v434 = vmul.f32 %v322, %v357
    %v435 = vmul.f32 %v323, %v362
    %v436 = vmul.f32 %v324, %v367
    %v437 = vmul.f32 %v325, %v372
    %v438 = vmul.f32 %v326, %v377
    %v439 = vmul.f32 %v327, %v382
    %v440 = vmul.f32 %v328, %v387
    %v441 = vmul.f32 %v329, %v392
    %v442 = vmul.f32 %v330, %v397
    %v443 = vmul.f32 %v331, %v402
    %v444 = vmul.f32 %v332, %v407
    %v445 = vmul.f32 %v333, %v412
    %v446 = vmul.f32 %v334, %v417
    %v447 = vmul.f32 %v335, %v422
    %v448 = vmul.f32 %v336, %v427
    %v449 = vmul.f32 %v337, %v432
    %v450 = vpack.c.bf16 %v435, %v434
    %v451 = vpack.c.bf16 %v437, %v436
    %v452 = vpack.c.bf16 %v439, %v438
    %v453 = vpack.c.bf16 %v441, %v440
    %v454 = vpack.c.bf16 %v443, %v442
    %v455 = vpack.c.bf16 %v445, %v444
    %v456 = vpack.c.bf16 %v447, %v446
    %v457 = vpack.c.bf16 %v449, %v448
    %v458 = vld [vmem:[%s2] sm:$0xf]
    %v459 = vld [vmem:[%s2 + $0x4] sm:$0xf]
    %v460 = vld [vmem:[%s2 + $0x8] sm:$0xf]
    %v461 = vld [vmem:[%s2 + $0xc] sm:$0xf]
    %v462 = vld [vmem:[%s2 + $0x10] sm:$0xf]
    %v463 = vld [vmem:[%s2 + $0x14] sm:$0xf]
    %v464 = vld [vmem:[%s2 + $0x18] sm:$0xf]
    %v465 = vld [vmem:[%s2 + $0x1c] sm:$0xf]
    %v466 = vld [vmem:[%s2 + $0x20] sm:$0xf]
    %v467 = vld [vmem:[%s2 + $0x24] sm:$0xf]
    %v468 = vld [vmem:[%s2 + $0x28] sm:$0xf]
    %v469 = vld [vmem:[%s2 + $0x2c] sm:$0xf]
    %v470 = vld [vmem:[%s2 + $0x30] sm:$0xf]
    %v471 = vld [vmem:[%s2 + $0x34] sm:$0xf]
    %v472 = vld [vmem:[%s2 + $0x38] sm:$0xf]
    %v473 = vld [vmem:[%s2 + $0x3c] sm:$0xf]
    %v474 = vld [vmem:[%s3] sm:$0x1]
    %v476 = vlaneseq
    %v477 = vshrl.u32 %v476, 7
    %v478 = vsub.s32 0, %v477
    %v479 = vrot.slane %v474, %v478
    %v497 = vunpack.c.l.b16 %v458
    %v498 = vunpack.c.l.b16 %v459
    %v499 = vunpack.c.l.b16 %v460
    %v500 = vunpack.c.l.b16 %v461
    %v501 = vunpack.c.l.b16 %v462
    %v502 = vunpack.c.l.b16 %v463
    %v503 = vunpack.c.l.b16 %v464
    %v504 = vunpack.c.l.b16 %v465
    %v505 = vunpack.c.l.b16 %v466
    %v506 = vunpack.c.l.b16 %v467
    %v507 = vunpack.c.l.b16 %v468
    %v508 = vunpack.c.l.b16 %v469
    %v509 = vunpack.c.l.b16 %v470
    %v510 = vunpack.c.l.b16 %v471
    %v511 = vunpack.c.l.b16 %v472
    %v512 = vunpack.c.l.b16 %v473
    %v513 = vpack.c.b16 %v498, %v497
    %v514 = vpack.c.b16 %v500, %v499
    %v515 = vpack.c.b16 %v502, %v501
    %v516 = vpack.c.b16 %v504, %v503
    %v517 = vpack.c.b16 %v506, %v505
    %v518 = vpack.c.b16 %v508, %v507
    %v519 = vpack.c.b16 %v510, %v509
    %v520 = vpack.c.b16 %v512, %v511
    %529 = vmatprep.subr.bf16.mxu0 0
    %530 = vmatpush1.bf16.msra.mxu0 %v513
    %531 = vmatprep.subr.bf16.mxu0 0
    %532 = vmatpush1.bf16.msra.mxu0 %v514
    %533 = vmatprep.subr.bf16.mxu0 0
    %534 = vmatpush1.bf16.msra.mxu0 %v515
    %535 = vmatprep.subr.bf16.mxu0 0
    %536 = vmatpush1.bf16.msra.mxu0 %v516
    %537 = vmatprep.subr.bf16.mxu0 0
    %538 = vmatpush1.bf16.msra.mxu0 %v517
    %539 = vmatprep.subr.bf16.mxu0 0
    %540 = vmatpush1.bf16.msra.mxu0 %v518
    %541 = vmatprep.subr.bf16.mxu0 0
    %542 = vmatpush1.bf16.msra.mxu0 %v519
    %543 = vmatprep.subr.bf16.mxu0 0
    %544 = vmatpush1.bf16.msra.mxu0 %v520
    %545 = vmatprep.subr.bf16.mxu0 0
    %546 = vmatpush1.bf16.msra.mxu0 0
    %547 = vmatprep.subr.bf16.mxu0 0
    %548 = vmatpush1.bf16.msra.mxu0 0
    %549 = vmatprep.subr.bf16.mxu0 0
    %550 = vmatpush1.bf16.msra.mxu0 0
    %551 = vmatprep.subr.bf16.mxu0 0
    %552 = vmatpush1.bf16.msra.mxu0 0
    %553 = vmatprep.subr.bf16.mxu0 0
    %554 = vmatpush1.bf16.msra.mxu0 0
    %555 = vmatprep.subr.bf16.mxu0 0
    %556 = vmatpush1.bf16.msra.mxu0 0
    %557 = vmatprep.subr.bf16.mxu0 0
    %558 = vmatpush1.bf16.msra.mxu0 0
    %559 = vmatprep.subr.bf16.mxu0 0
    %560 = vmatpush1.bf16.msra.mxu0 0
    %561 = vmatprep.mubr.bf16.mxu0 0
    %562 = vmatmul.mubr.bf16.gmra.mrb[0].mxu0 %v450
    %v563 = vpop.f32.mrb[0].mxu0
    %v564 = vadd.f32 %v479, %v563
    %v565 = vpop.f32.mrb[0].mxu0
    %v566 = vpop.f32.mrb[0].mxu0
    %v567 = vadd.f32 %v479, %v566
    %v568 = vpop.f32.mrb[0].mxu0
    %569 = vmatprep.mubr.bf16.mxu0 0
    %570 = vmatmul.mubr.bf16.gmra.mrb[0].mxu0 %v451
    %v571 = vpop.f32.mrb[0].mxu0
    %v572 = vadd.f32 %v479, %v571
    %v573 = vpop.f32.mrb[0].mxu0
    %v574 = vpop.f32.mrb[0].mxu0
    %v575 = vadd.f32 %v479, %v574
    %v576 = vpop.f32.mrb[0].mxu0
    %577 = vmatprep.mubr.bf16.mxu0 0
    %578 = vmatmul.mubr.bf16.gmra.mrb[0].mxu0 %v452
    %v579 = vpop.f32.mrb[0].mxu0
    %v580 = vadd.f32 %v479, %v579
    %v581 = vpop.f32.mrb[0].mxu0
    %v582 = vpop.f32.mrb[0].mxu0
    %v583 = vadd.f32 %v479, %v582
    %v584 = vpop.f32.mrb[0].mxu0
    %585 = vmatprep.mubr.bf16.mxu0 0
    %586 = vmatmul.mubr.bf16.gmra.mrb[0].mxu0 %v453
    %v587 = vpop.f32.mrb[0].mxu0
    %v588 = vadd.f32 %v479, %v587
    %v589 = vpop.f32.mrb[0].mxu0
    %v590 = vpop.f32.mrb[0].mxu0
    %v591 = vadd.f32 %v479, %v590
    %v592 = vpop.f32.mrb[0].mxu0
    %593 = vmatprep.mubr.bf16.mxu0 0
    %594 = vmatmul.mubr.bf16.gmra.mrb[0].mxu0 %v454
    %v595 = vpop.f32.mrb[0].mxu0
    %v596 = vadd.f32 %v479, %v595
    %v597 = vpop.f32.mrb[0].mxu0
    %v598 = vpop.f32.mrb[0].mxu0
    %v599 = vadd.f32 %v479, %v598
    %v600 = vpop.f32.mrb[0].mxu0
    %601 = vmatprep.mubr.bf16.mxu0 0
    %602 = vmatmul.mubr.bf16.gmra.mrb[0].mxu0 %v455
    %v603 = vpop.f32.mrb[0].mxu0
    %v604 = vadd.f32 %v479, %v603
    %v605 = vpop.f32.mrb[0].mxu0
    %v606 = vpop.f32.mrb[0].mxu0
    %v607 = vadd.f32 %v479, %v606
    %v608 = vpop.f32.mrb[0].mxu0
    %609 = vmatprep.mubr.bf16.mxu0 0
    %610 = vmatmul.mubr.bf16.gmra.mrb[0].mxu0 %v456
    %v611 = vpop.f32.mrb[0].mxu0
    %v612 = vadd.f32 %v479, %v611
    %v613 = vpop.f32.mrb[0].mxu0
    %v614 = vpop.f32.mrb[0].mxu0
    %v615 = vadd.f32 %v479, %v614
    %v616 = vpop.f32.mrb[0].mxu0
    %617 = vmatprep.mubr.bf16.mxu0 0
    %618 = vmatmul.mubr.bf16.gmra.mrb[0].mxu0 %v457
    %v619 = vpop.f32.mrb[0].mxu0
    %v620 = vadd.f32 %v479, %v619
    %v621 = vpop.f32.mrb[0].mxu0
    %v622 = vpop.f32.mrb[0].mxu0
    %v623 = vadd.f32 %v479, %v622
    %v624 = vpop.f32.mrb[0].mxu0
    %625 = vdwg.mxu0
    %v626 = vlaneseq
    %v627 = vand.u32 %v626, 127
    %vm628 = vcmp.lt.s32.totalorder %v627, 8
    %v629 = vsel %vm628, %v564, -inf
    %v630 = vsel %vm628, %v567, -inf
    %v631 = vsel %vm628, %v572, -inf
    %v632 = vsel %vm628, %v575, -inf
    %v633 = vsel %vm628, %v580, -inf
    %v634 = vsel %vm628, %v583, -inf
    %v635 = vsel %vm628, %v588, -inf
    %v636 = vsel %vm628, %v591, -inf
    %v637 = vsel %vm628, %v596, -inf
    %v638 = vsel %vm628, %v599, -inf
    %v639 = vsel %vm628, %v604, -inf
    %v640 = vsel %vm628, %v607, -inf
    %v641 = vsel %vm628, %v612, -inf
    %v642 = vsel %vm628, %v615, -inf
    %v643 = vsel %vm628, %v620, -inf
    %v644 = vsel %vm628, %v623, -inf
    %645 = vmax.xlane.f32.xlu0 %v629
    %v646 = vpop.xlane.xlu0 %645
    %647 = vmax.xlane.f32.xlu0 %v630
    %v648 = vpop.xlane.xlu0 %647
    %649 = vmax.xlane.f32.xlu0 %v631
    %v650 = vpop.xlane.xlu0 %649
    %651 = vmax.xlane.f32.xlu0 %v632
    %v652 = vpop.xlane.xlu0 %651
    %653 = vmax.xlane.f32.xlu0 %v633
    %v654 = vpop.xlane.xlu0 %653
    %655 = vmax.xlane.f32.xlu0 %v634
    %v656 = vpop.xlane.xlu0 %655
    %657 = vmax.xlane.f32.xlu0 %v635
    %v658 = vpop.xlane.xlu0 %657
    %659 = vmax.xlane.f32.xlu0 %v636
    %v660 = vpop.xlane.xlu0 %659
    %661 = vmax.xlane.f32.xlu0 %v637
    %v662 = vpop.xlane.xlu0 %661
    %663 = vmax.xlane.f32.xlu0 %v638
    %v664 = vpop.xlane.xlu0 %663
    %665 = vmax.xlane.f32.xlu0 %v639
    %v666 = vpop.xlane.xlu0 %665
    %667 = vmax.xlane.f32.xlu0 %v640
    %v668 = vpop.xlane.xlu0 %667
    %669 = vmax.xlane.f32.xlu0 %v641
    %v670 = vpop.xlane.xlu0 %669
    %671 = vmax.xlane.f32.xlu0 %v642
    %v672 = vpop.xlane.xlu0 %671
    %673 = vmax.xlane.f32.xlu0 %v643
    %v674 = vpop.xlane.xlu0 %673
    %675 = vmax.xlane.f32.xlu0 %v644
    %v676 = vpop.xlane.xlu0 %675
    %v677 = vsub.f32 %v629, %v646
    %v678 = vsub.f32 %v630, %v648
    %v679 = vsub.f32 %v631, %v650
    %v680 = vsub.f32 %v632, %v652
    %v681 = vsub.f32 %v633, %v654
    %v682 = vsub.f32 %v634, %v656
    %v683 = vsub.f32 %v635, %v658
    %v684 = vsub.f32 %v636, %v660
    %v685 = vsub.f32 %v637, %v662
    %v686 = vsub.f32 %v638, %v664
    %v687 = vsub.f32 %v639, %v666
    %v688 = vsub.f32 %v640, %v668
    %v689 = vsub.f32 %v641, %v670
    %v690 = vsub.f32 %v642, %v672
    %v691 = vsub.f32 %v643, %v674
    %v692 = vsub.f32 %v644, %v676
    %v693 = vmul.f32 %v677, 1.442695
    %v694 = vpow.pop %v693
    %v695 = vmul.f32 %v678, 1.442695
    %v696 = vpow.pop %v695
    %v697 = vmul.f32 %v679, 1.442695
    %v698 = vpow.pop %v697
    %v699 = vmul.f32 %v680, 1.442695
    %v700 = vpow.pop %v699
    %v701 = vmul.f32 %v681, 1.442695
    %v702 = vpow.pop %v701
    %v703 = vmul.f32 %v682, 1.442695
    %v704 = vpow.pop %v703
    %v705 = vmul.f32 %v683, 1.442695
    %v706 = vpow.pop %v705
    %v707 = vmul.f32 %v684, 1.442695
    %v708 = vpow.pop %v707
    %v709 = vmul.f32 %v685, 1.442695
    %v710 = vpow.pop %v709
    %v711 = vmul.f32 %v686, 1.442695
    %v712 = vpow.pop %v711
    %v713 = vmul.f32 %v687, 1.442695
    %v714 = vpow.pop %v713
    %v715 = vmul.f32 %v688, 1.442695
    %v716 = vpow.pop %v715
    %v717 = vmul.f32 %v689, 1.442695
    %v718 = vpow.pop %v717
    %v719 = vmul.f32 %v690, 1.442695
    %v720 = vpow.pop %v719
    %v721 = vmul.f32 %v691, 1.442695
    %v722 = vpow.pop %v721
    %v723 = vmul.f32 %v692, 1.442695
    %v724 = vpow.pop %v723
    %725 = vadd.xlane.f32.xlu0 %v694
    %v726 = vpop.xlane.xlu0 %725
    %727 = vadd.xlane.f32.xlu0 %v696
    %v728 = vpop.xlane.xlu0 %727
    %729 = vadd.xlane.f32.xlu0 %v698
    %v730 = vpop.xlane.xlu0 %729
    %731 = vadd.xlane.f32.xlu0 %v700
    %v732 = vpop.xlane.xlu0 %731
    %733 = vadd.xlane.f32.xlu0 %v702
    %v734 = vpop.xlane.xlu0 %733
    %735 = vadd.xlane.f32.xlu0 %v704
    %v736 = vpop.xlane.xlu0 %735
    %737 = vadd.xlane.f32.xlu0 %v706
    %v738 = vpop.xlane.xlu0 %737
    %739 = vadd.xlane.f32.xlu0 %v708
    %v740 = vpop.xlane.xlu0 %739
    %741 = vadd.xlane.f32.xlu0 %v710
    %v742 = vpop.xlane.xlu0 %741
    %743 = vadd.xlane.f32.xlu0 %v712
    %v744 = vpop.xlane.xlu0 %743
    %745 = vadd.xlane.f32.xlu0 %v714
    %v746 = vpop.xlane.xlu0 %745
    %747 = vadd.xlane.f32.xlu0 %v716
    %v748 = vpop.xlane.xlu0 %747
    %749 = vadd.xlane.f32.xlu0 %v718
    %v750 = vpop.xlane.xlu0 %749
    %751 = vadd.xlane.f32.xlu0 %v720
    %v752 = vpop.xlane.xlu0 %751
    %753 = vadd.xlane.f32.xlu0 %v722
    %v754 = vpop.xlane.xlu0 %753
    %755 = vadd.xlane.f32.xlu0 %v724
    %v756 = vpop.xlane.xlu0 %755
    %v757 = vlog2.pop %v726
    %v758 = vmul.f32 %v757, 0.6931472
    %v759 = vlog2.pop %v728
    %v760 = vmul.f32 %v759, 0.6931472
    %v761 = vlog2.pop %v730
    %v762 = vmul.f32 %v761, 0.6931472
    %v763 = vlog2.pop %v732
    %v764 = vmul.f32 %v763, 0.6931472
    %v765 = vlog2.pop %v734
    %v766 = vmul.f32 %v765, 0.6931472
    %v767 = vlog2.pop %v736
    %v768 = vmul.f32 %v767, 0.6931472
    %v769 = vlog2.pop %v738
    %v770 = vmul.f32 %v769, 0.6931472
    %v771 = vlog2.pop %v740
    %v772 = vmul.f32 %v771, 0.6931472
    %v773 = vlog2.pop %v742
    %v774 = vmul.f32 %v773, 0.6931472
    %v775 = vlog2.pop %v744
    %v776 = vmul.f32 %v775, 0.6931472
    %v777 = vlog2.pop %v746
    %v778 = vmul.f32 %v777, 0.6931472
    %v779 = vlog2.pop %v748
    %v780 = vmul.f32 %v779, 0.6931472
    %v781 = vlog2.pop %v750
    %v782 = vmul.f32 %v781, 0.6931472
    %v783 = vlog2.pop %v752
    %v784 = vmul.f32 %v783, 0.6931472
    %v785 = vlog2.pop %v754
    %v786 = vmul.f32 %v785, 0.6931472
    %v787 = vlog2.pop %v756
    %v788 = vmul.f32 %v787, 0.6931472
    %v789 = vsub.f32 %v677, %v758
    %v790 = vsub.f32 %v678, %v760
    %v791 = vsub.f32 %v679, %v762
    %v792 = vsub.f32 %v680, %v764
    %v793 = vsub.f32 %v681, %v766
    %v794 = vsub.f32 %v682, %v768
    %v795 = vsub.f32 %v683, %v770
    %v796 = vsub.f32 %v684, %v772
    %v797 = vsub.f32 %v685, %v774
    %v798 = vsub.f32 %v686, %v776
    %v799 = vsub.f32 %v687, %v778
    %v800 = vsub.f32 %v688, %v780
    %v801 = vsub.f32 %v689, %v782
    %v802 = vsub.f32 %v690, %v784
    %v803 = vsub.f32 %v691, %v786
    %v804 = vsub.f32 %v692, %v788
    %805 = vst [vmem:[%s5] sm:$0xff] %v789
    %806 = vst [vmem:[%s5 + $0x8] sm:$0xff] %v790
    %807 = vst [vmem:[%s5 + $0x10] sm:$0xff] %v791
    %808 = vst [vmem:[%s5 + $0x18] sm:$0xff] %v792
    %809 = vst [vmem:[%s5 + $0x20] sm:$0xff] %v793
    %810 = vst [vmem:[%s5 + $0x28] sm:$0xff] %v794
    %811 = vst [vmem:[%s5 + $0x30] sm:$0xff] %v795
    %812 = vst [vmem:[%s5 + $0x38] sm:$0xff] %v796
    %813 = vst [vmem:[%s5 + $0x40] sm:$0xff] %v797
    %814 = vst [vmem:[%s5 + $0x48] sm:$0xff] %v798
    %815 = vst [vmem:[%s5 + $0x50] sm:$0xff] %v799
    %816 = vst [vmem:[%s5 + $0x58] sm:$0xff] %v800
    %817 = vst [vmem:[%s5 + $0x60] sm:$0xff] %v801
    %818 = vst [vmem:[%s5 + $0x68] sm:$0xff] %v802
    %819 = vst [vmem:[%s5 + $0x70] sm:$0xff] %v803
    %820 = vst [vmem:[%s5 + $0x78] sm:$0xff] %v804
  $region29: #{gcn_forward.3} parent=0 // pred_fallthru
    _
  // Predicated region
  $region30: #{gcn_forward.3} parent=0 // pred_check
    _
  $region31: #{gcn_forward.3} parent=0 // pred_check_branch
    %822 = sbr.rel (0) target = $region33
  $region32: #{gcn_forward.3} parent=0 // pred_region
    _
  $region33: #{gcn_forward.3} parent=0 // pred_fallthru
    _
  // Predicated region
  $region34: #{gcn_forward.3} parent=0 // pred_check
    _
  $region35: #{gcn_forward.3} parent=0 // pred_check_branch
    %824 = sbr.rel (0) target = $region37
  $region36: #{gcn_forward.3} parent=0 // pred_region
    _
  $region37: #{gcn_forward.3} parent=0 // pred_fallthru
    _

</llo_original>
